<compile_context>
chip_gen: v6e
topology: v6e:2x2x1
jax: 0.10.0
libtpu: 0.0.40
codegen_flags: <defaults>
</compile_context>

<pallas_src>
import functools

import jax
import jax.numpy as jnp
from jax import lax
from jax.experimental import pallas as pl
from jax.experimental.pallas import tpu as pltpu

PRED_LANES = 128  # lane-dense padding for the 2-wide position projection


def _decoder_kernel(seq_len, h_dim,
                    # inputs
                    last_pos_rel_ref, h0_ref, c0_ref,
                    w_e_ref, b_e_ref,                # spatial_embedding (2,E),(1,E)
                    w_ih_ref, w_hh_ref, b_lstm_ref,  # LSTM weights (t=0 path, gate-permuted)
                    w_comb_ref, b_comb_ref,          # fused recurrence (H,4H),(1,4H)
                    w_p_ref, b_p_ref,                # hidden2pos, lane-padded (H,128),(1,128)
                    # outputs
                    pred_ref, h_out_ref,
                    # scratch
                    h_hist_ref):
    batch = h0_ref.shape[0]

    def lstm_cell(gates, c_prev):
        # Gate order permuted to [i, f, o, g] in the wrapper so the three
        # sigmoids collapse to a single EUP dispatch over a 3H-lane slab.
        sig = jax.nn.sigmoid(gates[:, :3 * h_dim])
        i_g = sig[:, 0 * h_dim:1 * h_dim]
        f_g = sig[:, 1 * h_dim:2 * h_dim]
        o_g = sig[:, 2 * h_dim:3 * h_dim]
        g_g = jnp.tanh(gates[:, 3 * h_dim:4 * h_dim])
        c_new = f_g * c_prev + i_g * g_g
        h_new = o_g * jnp.tanh(c_new)
        return h_new, c_new

    # ---- t = 0: external decoder-input path --------------------------------
    dec_in0 = (jnp.dot(last_pos_rel_ref[...], w_e_ref[...],
                       preferred_element_type=jnp.float32) + b_e_ref[...])
    gates0 = (jnp.dot(dec_in0, w_ih_ref[...], preferred_element_type=jnp.float32)
              + jnp.dot(h0_ref[...], w_hh_ref[...],
                        preferred_element_type=jnp.float32)
              + b_lstm_ref[...])
    h, c = lstm_cell(gates0, c0_ref[...])
    h_hist_ref[pl.ds(0, batch), :] = h

    # ---- t >= 1: fused single-matmul recurrence ----------------------------
    # Hoist loop-invariant ref reads out of the (unrolled) loop.
    w_comb = w_comb_ref[...]
    b_comb = b_comb_ref[...]

    def step(t, carry):
        h_prev, c_prev = carry
        gates = (jnp.dot(h_prev, w_comb, preferred_element_type=jnp.float32)
                 + b_comb)
        h_new, c_new = lstm_cell(gates, c_prev)
        row = pl.multiple_of(t * batch, batch)   # aligned sublane store
        h_hist_ref[pl.ds(row, batch), :] = h_new
        return (h_new, c_new)

    h, c = lax.fori_loop(1, seq_len, step, (h, c), unroll=True)
    h_out_ref[...] = h

    # ---- deferred hidden2pos: one lane-dense matmul + one unmasked store ----
    pred_ref[...] = (jnp.dot(h_hist_ref[...], w_p_ref[...],
                             preferred_element_type=jnp.float32) + b_p_ref[...])


def _permute_gates(w):
    """Reorder last-axis gate blocks from PyTorch [i, f, g, o] to [i, f, o, g]."""
    i, f, g, o = jnp.split(w, 4, axis=-1)
    return jnp.concatenate([i, f, o, g], axis=-1)


def decoder_forward(last_pos, last_pos_rel, state_tuple, params, seq_len):
    """Pallas wrapper. state_tuple = (h, c), each (1, batch, h_dim)."""
    del last_pos  # curr_pos chain never reaches an output of the module
    h0, c0 = state_tuple
    batch = last_pos_rel.shape[0]
    h_dim = h0.shape[-1]

    h0_2d = h0.reshape(batch, h_dim)
    c0_2d = c0.reshape(batch, h_dim)

    w_e, b_e = params["w_e"], params["b_e"]
    w_p, b_p = params["w_p"], params["b_p"]
    # Permute gate order once so the kernel can do one sigmoid over 3H lanes.
    w_ih = _permute_gates(params["w_ih"])
    w_hh = _permute_gates(params["w_hh"])
    b_lstm = _permute_gates(params["b_lstm"])

    # One-time (weight-only) fusion of hidden2pos -> spatial_embedding -> w_ih
    # into the recurrence matmul (inherits the permuted gate order).
    w_comb = w_hh + (w_p @ w_e) @ w_ih                       # (H, 4H)
    b_comb = b_lstm + (b_p @ w_e + b_e) @ w_ih               # (1, 4H)

    # Lane-dense (128-wide) padded hidden2pos weights for the deferred output.
    w_p_pad = jnp.zeros((h_dim, PRED_LANES), jnp.float32).at[:, :2].set(w_p)
    b_p_pad = jnp.zeros((1, PRED_LANES), jnp.float32).at[:, :2].set(b_p)

    kernel = functools.partial(_decoder_kernel, seq_len, h_dim)
    vmem = pl.BlockSpec(memory_space=pltpu.MemorySpace.VMEM)

    inputs = (last_pos_rel, h0_2d, c0_2d,
              w_e, b_e, w_ih, w_hh, b_lstm,
              w_comb, b_comb, w_p_pad, b_p_pad)

    pred_pad, h_final = pl.pallas_call(
        kernel,
        out_shape=(
            jax.ShapeDtypeStruct((seq_len * batch, PRED_LANES), jnp.float32),
            jax.ShapeDtypeStruct((batch, h_dim), jnp.float32),
        ),
        in_specs=[vmem] * len(inputs),
        out_specs=(vmem, vmem),
        scratch_shapes=[pltpu.VMEM((seq_len * batch, h_dim), jnp.float32)],
    )(*inputs)

    pred = pred_pad[:, :2].reshape(seq_len, batch, 2)
    return pred, h_final.reshape(1, batch, h_dim)


def _reference_forward(last_pos, last_pos_rel, state_tuple, params, seq_len):
    """Pure-JAX reference of the PyTorch forward, for a correctness check."""
    h, c = state_tuple[0][0], state_tuple[1][0]
    h_dim = h.shape[-1]
    dec_in = last_pos_rel @ params["w_e"] + params["b_e"]
    preds = []
    for _ in range(seq_len):
        gates = dec_in @ params["w_ih"] + h @ params["w_hh"] + params["b_lstm"]
        i_g = jax.nn.sigmoid(gates[:, 0 * h_dim:1 * h_dim])
        f_g = jax.nn.sigmoid(gates[:, 1 * h_dim:2 * h_dim])
        g_g = jnp.tanh(gates[:, 2 * h_dim:3 * h_dim])
        o_g = jax.nn.sigmoid(gates[:, 3 * h_dim:4 * h_dim])
        c = f_g * c + i_g * g_g
        h = o_g * jnp.tanh(c)
        rel = h @ params["w_p"] + params["b_p"]
        last_pos = rel + last_pos
        dec_in = rel @ params["w_e"] + params["b_e"]
        preds.append(rel)
    return jnp.stack(preds, axis=0), h[None]


if __name__ == "__main__":
    # Small shapes consistent with the module defaults.
    seq_len = 8
    batch = 8
    emb_dim = 64
    h_dim = 128

    key = jax.random.PRNGKey(0)
    keys = jax.random.split(key, 12)

    def uni(k, shape, fan):
        bound = 1.0 / jnp.sqrt(jnp.float32(fan))
        return jax.random.uniform(k, shape, jnp.float32, -bound, bound)

    # Parameters stored pre-transposed (in_features, out_features) for x @ W.
    params = {
        "w_e": uni(keys[0], (2, emb_dim), 2),                 # spatial_embedding.weight^T
        "b_e": uni(keys[1], (1, emb_dim), 2),                 # spatial_embedding.bias
        "w_ih": uni(keys[2], (emb_dim, 4 * h_dim), h_dim),    # LSTM weight_ih^T
        "w_hh": uni(keys[3], (h_dim, 4 * h_dim), h_dim),      # LSTM weight_hh^T
        "b_lstm": uni(keys[4], (1, 4 * h_dim), h_dim)         # b_ih + b_hh fused
                  + uni(keys[5], (1, 4 * h_dim), h_dim),
        "w_p": uni(keys[6], (h_dim, 2), h_dim),               # hidden2pos.weight^T
        "b_p": uni(keys[7], (1, 2), h_dim),                   # hidden2pos.bias
    }

    last_pos = jax.random.normal(keys[8], (batch, 2), jnp.float32)
    last_pos_rel = jax.random.normal(keys[9], (batch, 2), jnp.float32)
    h0 = jax.random.normal(keys[10], (1, batch, h_dim), jnp.float32)
    c0 = jax.random.normal(keys[11], (1, batch, h_dim), jnp.float32)

    pred, h_final = decoder_forward(last_pos, last_pos_rel, (h0, c0), params, seq_len)
    jax.block_until_ready((pred, h_final))

    pred_ref, h_ref = _reference_forward(last_pos, last_pos_rel, (h0, c0), params, seq_len)
    assert pred.shape == (seq_len, batch, 2)
    assert h_final.shape == (1, batch, h_dim)
    assert jnp.allclose(pred, pred_ref, rtol=1e-3, atol=1e-3)
    assert jnp.allclose(h_final, h_ref, rtol=1e-3, atol=1e-3)

    print("KERNEL_OK")
</pallas_src>

<mosaic_0001>
module attributes {stable_mosaic.version = 11 : i64} {
  func.func @_decoder_kernel(%arg0: memref<8x2xf32, #tpu.memory_space<vmem>>, %arg1: memref<8x128xf32, #tpu.memory_space<vmem>>, %arg2: memref<8x128xf32, #tpu.memory_space<vmem>>, %arg3: memref<2x64xf32, #tpu.memory_space<vmem>>, %arg4: memref<1x64xf32, #tpu.memory_space<vmem>>, %arg5: memref<64x512xf32, #tpu.memory_space<vmem>>, %arg6: memref<128x512xf32, #tpu.memory_space<vmem>>, %arg7: memref<1x512xf32, #tpu.memory_space<vmem>>, %arg8: memref<128x512xf32, #tpu.memory_space<vmem>>, %arg9: memref<1x512xf32, #tpu.memory_space<vmem>>, %arg10: memref<128x128xf32, #tpu.memory_space<vmem>>, %arg11: memref<1x128xf32, #tpu.memory_space<vmem>>, %arg12: memref<64x128xf32, #tpu.memory_space<vmem>>, %arg13: memref<8x128xf32, #tpu.memory_space<vmem>>, %arg14: memref<64x128xf32, #tpu.memory_space<vmem>>) attributes {dimension_semantics = [], scalar_prefetch = 0 : i64, scratch_operands = 1 : i64, tpu.core_type = #tpu.core_type<tc>} {
    %c0 = arith.constant 0 : index
    %c0_0 = arith.constant 0 : index
    %0 = vector.load %arg0[%c0, %c0_0] : memref<8x2xf32, #tpu.memory_space<vmem>>, vector<8x2xf32>
    %c0_1 = arith.constant 0 : index
    %c0_2 = arith.constant 0 : index
    %1 = vector.load %arg3[%c0_1, %c0_2] : memref<2x64xf32, #tpu.memory_space<vmem>>, vector<2x64xf32>
    %cst = arith.constant dense<0.000000e+00> : vector<8x64xf32>
    %2 = tpu.matmul %0, %1, %cst {dimension_numbers = #tpu.dot_dimension_numbers<[1], [0], [0], [1], [0, 0, 1, 1], [], []>} : vector<8x2xf32>, vector<2x64xf32>, vector<8x64xf32> -> vector<8x64xf32>
    %c0_3 = arith.constant 0 : index
    %c0_4 = arith.constant 0 : index
    %3 = vector.load %arg4[%c0_3, %c0_4] : memref<1x64xf32, #tpu.memory_space<vmem>>, vector<1x64xf32>
    %4 = vector.broadcast %3 : vector<1x64xf32> to vector<8x64xf32>
    %5 = arith.addf %2, %4 : vector<8x64xf32>
    %c0_5 = arith.constant 0 : index
    %c0_6 = arith.constant 0 : index
    %6 = vector.load %arg5[%c0_5, %c0_6] : memref<64x512xf32, #tpu.memory_space<vmem>>, vector<64x512xf32>
    %cst_7 = arith.constant dense<0.000000e+00> : vector<8x512xf32>
    %7 = tpu.matmul %5, %6, %cst_7 {dimension_numbers = #tpu.dot_dimension_numbers<[1], [0], [0], [1], [0, 0, 1, 1], [], []>} : vector<8x64xf32>, vector<64x512xf32>, vector<8x512xf32> -> vector<8x512xf32>
    %c0_8 = arith.constant 0 : index
    %c0_9 = arith.constant 0 : index
    %8 = vector.load %arg1[%c0_8, %c0_9] : memref<8x128xf32, #tpu.memory_space<vmem>>, vector<8x128xf32>
    %c0_10 = arith.constant 0 : index
    %c0_11 = arith.constant 0 : index
    %9 = vector.load %arg6[%c0_10, %c0_11] : memref<128x512xf32, #tpu.memory_space<vmem>>, vector<128x512xf32>
    %cst_12 = arith.constant dense<0.000000e+00> : vector<8x512xf32>
    %10 = tpu.matmul %8, %9, %cst_12 {dimension_numbers = #tpu.dot_dimension_numbers<[1], [0], [0], [1], [0, 0, 1, 1], [], []>} : vector<8x128xf32>, vector<128x512xf32>, vector<8x512xf32> -> vector<8x512xf32>
    %11 = arith.addf %7, %10 : vector<8x512xf32>
    %c0_13 = arith.constant 0 : index
    %c0_14 = arith.constant 0 : index
    %12 = vector.load %arg7[%c0_13, %c0_14] : memref<1x512xf32, #tpu.memory_space<vmem>>, vector<1x512xf32>
    %13 = vector.broadcast %12 : vector<1x512xf32> to vector<8x512xf32>
    %14 = arith.addf %11, %13 : vector<8x512xf32>
    %c0_15 = arith.constant 0 : index
    %c0_16 = arith.constant 0 : index
    %15 = vector.load %arg2[%c0_15, %c0_16] : memref<8x128xf32, #tpu.memory_space<vmem>>, vector<8x128xf32>
    %16 = vector.extract_strided_slice %14 {offsets = [0, 0], sizes = [8, 384], strides = [1, 1]} : vector<8x512xf32> to vector<8x384xf32>
    %17 = arith.negf %16 : vector<8x384xf32>
    %18 = math.exp %17 : vector<8x384xf32>
    %cst_17 = arith.constant 1.000000e+00 : f32
    %19 = vector.broadcast %cst_17 : f32 to vector<8x384xf32>
    %20 = arith.addf %19, %18 : vector<8x384xf32>
    %21 = arith.divf %19, %20 : vector<8x384xf32>
    %22 = vector.extract_strided_slice %21 {offsets = [0, 0], sizes = [8, 128], strides = [1, 1]} : vector<8x384xf32> to vector<8x128xf32>
    %23 = vector.extract_strided_slice %21 {offsets = [0, 128], sizes = [8, 128], strides = [1, 1]} : vector<8x384xf32> to vector<8x128xf32>
    %24 = vector.extract_strided_slice %21 {offsets = [0, 256], sizes = [8, 128], strides = [1, 1]} : vector<8x384xf32> to vector<8x128xf32>
    %25 = vector.extract_strided_slice %14 {offsets = [0, 384], sizes = [8, 128], strides = [1, 1]} : vector<8x512xf32> to vector<8x128xf32>
    %26 = math.tanh %25 : vector<8x128xf32>
    %27 = arith.mulf %23, %15 : vector<8x128xf32>
    %28 = arith.mulf %22, %26 : vector<8x128xf32>
    %29 = arith.addf %27, %28 : vector<8x128xf32>
    %30 = math.tanh %29 : vector<8x128xf32>
    %31 = arith.mulf %24, %30 : vector<8x128xf32>
    %c0_18 = arith.constant 0 : index
    %c0_19 = arith.constant 0 : index
    %32 = vector.load %arg14[%c0_18, %c0_19] : memref<64x128xf32, #tpu.memory_space<vmem>>, vector<8x128xf32>
    tpu.vector_store %arg14[%c0_18, %c0_19], %31 {strides = array<i32>} : memref<64x128xf32, #tpu.memory_space<vmem>>, vector<8x128xf32>,
    %c0_20 = arith.constant 0 : index
    %c0_21 = arith.constant 0 : index
    %33 = vector.load %arg8[%c0_20, %c0_21] : memref<128x512xf32, #tpu.memory_space<vmem>>, vector<128x512xf32>
    %c0_22 = arith.constant 0 : index
    %c0_23 = arith.constant 0 : index
    %34 = vector.load %arg9[%c0_22, %c0_23] : memref<1x512xf32, #tpu.memory_space<vmem>>, vector<1x512xf32>
    %c1_i32 = arith.constant 1 : i32
    %cst_24 = arith.constant dense<0.000000e+00> : vector<8x512xf32>
    %35 = tpu.matmul %31, %33, %cst_24 {dimension_numbers = #tpu.dot_dimension_numbers<[1], [0], [0], [1], [0, 0, 1, 1], [], []>} : vector<8x128xf32>, vector<128x512xf32>, vector<8x512xf32> -> vector<8x512xf32>
    %36 = vector.broadcast %34 : vector<1x512xf32> to vector<8x512xf32>
    %37 = arith.addf %35, %36 : vector<8x512xf32>
    %38 = vector.extract_strided_slice %37 {offsets = [0, 0], sizes = [8, 384], strides = [1, 1]} : vector<8x512xf32> to vector<8x384xf32>
    %39 = arith.negf %38 : vector<8x384xf32>
    %40 = math.exp %39 : vector<8x384xf32>
    %cst_25 = arith.constant 1.000000e+00 : f32
    %41 = vector.broadcast %cst_25 : f32 to vector<8x384xf32>
    %42 = arith.addf %41, %40 : vector<8x384xf32>
    %43 = arith.divf %41, %42 : vector<8x384xf32>
    %44 = vector.extract_strided_slice %43 {offsets = [0, 0], sizes = [8, 128], strides = [1, 1]} : vector<8x384xf32> to vector<8x128xf32>
    %45 = vector.extract_strided_slice %43 {offsets = [0, 128], sizes = [8, 128], strides = [1, 1]} : vector<8x384xf32> to vector<8x128xf32>
    %46 = vector.extract_strided_slice %43 {offsets = [0, 256], sizes = [8, 128], strides = [1, 1]} : vector<8x384xf32> to vector<8x128xf32>
    %47 = vector.extract_strided_slice %37 {offsets = [0, 384], sizes = [8, 128], strides = [1, 1]} : vector<8x512xf32> to vector<8x128xf32>
    %48 = math.tanh %47 : vector<8x128xf32>
    %49 = arith.mulf %45, %29 : vector<8x128xf32>
    %50 = arith.mulf %44, %48 : vector<8x128xf32>
    %51 = arith.addf %49, %50 : vector<8x128xf32>
    %52 = math.tanh %51 : vector<8x128xf32>
    %53 = arith.mulf %46, %52 : vector<8x128xf32>
    %c8_i32 = arith.constant 8 : i32
    %54 = arith.muli %c1_i32, %c8_i32 : i32
    %55 = tpu.assume_multiple %54, 8 : i32
    %56 = arith.index_cast %55 : i32 to index
    %c0_26 = arith.constant 0 : index
    %57 = vector.load %arg14[%56, %c0_26] : memref<64x128xf32, #tpu.memory_space<vmem>>, vector<8x128xf32>
    tpu.vector_store %arg14[%56, %c0_26], %53 {strides = array<i32>} : memref<64x128xf32, #tpu.memory_space<vmem>>, vector<8x128xf32>,
    %c2_i32 = arith.constant 2 : i32
    %cst_27 = arith.constant dense<0.000000e+00> : vector<8x512xf32>
    %58 = tpu.matmul %53, %33, %cst_27 {dimension_numbers = #tpu.dot_dimension_numbers<[1], [0], [0], [1], [0, 0, 1, 1], [], []>} : vector<8x128xf32>, vector<128x512xf32>, vector<8x512xf32> -> vector<8x512xf32>
    %59 = vector.broadcast %34 : vector<1x512xf32> to vector<8x512xf32>
    %60 = arith.addf %58, %59 : vector<8x512xf32>
    %61 = vector.extract_strided_slice %60 {offsets = [0, 0], sizes = [8, 384], strides = [1, 1]} : vector<8x512xf32> to vector<8x384xf32>
    %62 = arith.negf %61 : vector<8x384xf32>
    %63 = math.exp %62 : vector<8x384xf32>
    %cst_28 = arith.constant 1.000000e+00 : f32
    %64 = vector.broadcast %cst_28 : f32 to vector<8x384xf32>
    %65 = arith.addf %64, %63 : vector<8x384xf32>
    %66 = arith.divf %64, %65 : vector<8x384xf32>
    %67 = vector.extract_strided_slice %66 {offsets = [0, 0], sizes = [8, 128], strides = [1, 1]} : vector<8x384xf32> to vector<8x128xf32>
    %68 = vector.extract_strided_slice %66 {offsets = [0, 128], sizes = [8, 128], strides = [1, 1]} : vector<8x384xf32> to vector<8x128xf32>
    %69 = vector.extract_strided_slice %66 {offsets = [0, 256], sizes = [8, 128], strides = [1, 1]} : vector<8x384xf32> to vector<8x128xf32>
    %70 = vector.extract_strided_slice %60 {offsets = [0, 384], sizes = [8, 128], strides = [1, 1]} : vector<8x512xf32> to vector<8x128xf32>
    %71 = math.tanh %70 : vector<8x128xf32>
    %72 = arith.mulf %68, %51 : vector<8x128xf32>
    %73 = arith.mulf %67, %71 : vector<8x128xf32>
    %74 = arith.addf %72, %73 : vector<8x128xf32>
    %75 = math.tanh %74 : vector<8x128xf32>
    %76 = arith.mulf %69, %75 : vector<8x128xf32>
    %c8_i32_29 = arith.constant 8 : i32
    %77 = arith.muli %c2_i32, %c8_i32_29 : i32
    %78 = tpu.assume_multiple %77, 8 : i32
    %79 = arith.index_cast %78 : i32 to index
    %c0_30 = arith.constant 0 : index
    %80 = vector.load %arg14[%79, %c0_30] : memref<64x128xf32, #tpu.memory_space<vmem>>, vector<8x128xf32>
    tpu.vector_store %arg14[%79, %c0_30], %76 {strides = array<i32>} : memref<64x128xf32, #tpu.memory_space<vmem>>, vector<8x128xf32>,
    %c3_i32 = arith.constant 3 : i32
    %cst_31 = arith.constant dense<0.000000e+00> : vector<8x512xf32>
    %81 = tpu.matmul %76, %33, %cst_31 {dimension_numbers = #tpu.dot_dimension_numbers<[1], [0], [0], [1], [0, 0, 1, 1], [], []>} : vector<8x128xf32>, vector<128x512xf32>, vector<8x512xf32> -> vector<8x512xf32>
    %82 = vector.broadcast %34 : vector<1x512xf32> to vector<8x512xf32>
    %83 = arith.addf %81, %82 : vector<8x512xf32>
    %84 = vector.extract_strided_slice %83 {offsets = [0, 0], sizes = [8, 384], strides = [1, 1]} : vector<8x512xf32> to vector<8x384xf32>
    %85 = arith.negf %84 : vector<8x384xf32>
    %86 = math.exp %85 : vector<8x384xf32>
    %cst_32 = arith.constant 1.000000e+00 : f32
    %87 = vector.broadcast %cst_32 : f32 to vector<8x384xf32>
    %88 = arith.addf %87, %86 : vector<8x384xf32>
    %89 = arith.divf %87, %88 : vector<8x384xf32>
    %90 = vector.extract_strided_slice %89 {offsets = [0, 0], sizes = [8, 128], strides = [1, 1]} : vector<8x384xf32> to vector<8x128xf32>
    %91 = vector.extract_strided_slice %89 {offsets = [0, 128], sizes = [8, 128], strides = [1, 1]} : vector<8x384xf32> to vector<8x128xf32>
    %92 = vector.extract_strided_slice %89 {offsets = [0, 256], sizes = [8, 128], strides = [1, 1]} : vector<8x384xf32> to vector<8x128xf32>
    %93 = vector.extract_strided_slice %83 {offsets = [0, 384], sizes = [8, 128], strides = [1, 1]} : vector<8x512xf32> to vector<8x128xf32>
    %94 = math.tanh %93 : vector<8x128xf32>
    %95 = arith.mulf %91, %74 : vector<8x128xf32>
    %96 = arith.mulf %90, %94 : vector<8x128xf32>
    %97 = arith.addf %95, %96 : vector<8x128xf32>
    %98 = math.tanh %97 : vector<8x128xf32>
    %99 = arith.mulf %92, %98 : vector<8x128xf32>
    %c8_i32_33 = arith.constant 8 : i32
    %100 = arith.muli %c3_i32, %c8_i32_33 : i32
    %101 = tpu.assume_multiple %100, 8 : i32
    %102 = arith.index_cast %101 : i32 to index
    %c0_34 = arith.constant 0 : index
    %103 = vector.load %arg14[%102, %c0_34] : memref<64x128xf32, #tpu.memory_space<vmem>>, vector<8x128xf32>
    tpu.vector_store %arg14[%102, %c0_34], %99 {strides = array<i32>} : memref<64x128xf32, #tpu.memory_space<vmem>>, vector<8x128xf32>,
    %c4_i32 = arith.constant 4 : i32
    %cst_35 = arith.constant dense<0.000000e+00> : vector<8x512xf32>
    %104 = tpu.matmul %99, %33, %cst_35 {dimension_numbers = #tpu.dot_dimension_numbers<[1], [0], [0], [1], [0, 0, 1, 1], [], []>} : vector<8x128xf32>, vector<128x512xf32>, vector<8x512xf32> -> vector<8x512xf32>
    %105 = vector.broadcast %34 : vector<1x512xf32> to vector<8x512xf32>
    %106 = arith.addf %104, %105 : vector<8x512xf32>
    %107 = vector.extract_strided_slice %106 {offsets = [0, 0], sizes = [8, 384], strides = [1, 1]} : vector<8x512xf32> to vector<8x384xf32>
    %108 = arith.negf %107 : vector<8x384xf32>
    %109 = math.exp %108 : vector<8x384xf32>
    %cst_36 = arith.constant 1.000000e+00 : f32
    %110 = vector.broadcast %cst_36 : f32 to vector<8x384xf32>
    %111 = arith.addf %110, %109 : vector<8x384xf32>
    %112 = arith.divf %110, %111 : vector<8x384xf32>
    %113 = vector.extract_strided_slice %112 {offsets = [0, 0], sizes = [8, 128], strides = [1, 1]} : vector<8x384xf32> to vector<8x128xf32>
    %114 = vector.extract_strided_slice %112 {offsets = [0, 128], sizes = [8, 128], strides = [1, 1]} : vector<8x384xf32> to vector<8x128xf32>
    %115 = vector.extract_strided_slice %112 {offsets = [0, 256], sizes = [8, 128], strides = [1, 1]} : vector<8x384xf32> to vector<8x128xf32>
    %116 = vector.extract_strided_slice %106 {offsets = [0, 384], sizes = [8, 128], strides = [1, 1]} : vector<8x512xf32> to vector<8x128xf32>
    %117 = math.tanh %116 : vector<8x128xf32>
    %118 = arith.mulf %114, %97 : vector<8x128xf32>
    %119 = arith.mulf %113, %117 : vector<8x128xf32>
    %120 = arith.addf %118, %119 : vector<8x128xf32>
    %121 = math.tanh %120 : vector<8x128xf32>
    %122 = arith.mulf %115, %121 : vector<8x128xf32>
    %c8_i32_37 = arith.constant 8 : i32
    %123 = arith.muli %c4_i32, %c8_i32_37 : i32
    %124 = tpu.assume_multiple %123, 8 : i32
    %125 = arith.index_cast %124 : i32 to index
    %c0_38 = arith.constant 0 : index
    %126 = vector.load %arg14[%125, %c0_38] : memref<64x128xf32, #tpu.memory_space<vmem>>, vector<8x128xf32>
    tpu.vector_store %arg14[%125, %c0_38], %122 {strides = array<i32>} : memref<64x128xf32, #tpu.memory_space<vmem>>, vector<8x128xf32>,
    %c5_i32 = arith.constant 5 : i32
    %cst_39 = arith.constant dense<0.000000e+00> : vector<8x512xf32>
    %127 = tpu.matmul %122, %33, %cst_39 {dimension_numbers = #tpu.dot_dimension_numbers<[1], [0], [0], [1], [0, 0, 1, 1], [], []>} : vector<8x128xf32>, vector<128x512xf32>, vector<8x512xf32> -> vector<8x512xf32>
    %128 = vector.broadcast %34 : vector<1x512xf32> to vector<8x512xf32>
    %129 = arith.addf %127, %128 : vector<8x512xf32>
    %130 = vector.extract_strided_slice %129 {offsets = [0, 0], sizes = [8, 384], strides = [1, 1]} : vector<8x512xf32> to vector<8x384xf32>
    %131 = arith.negf %130 : vector<8x384xf32>
    %132 = math.exp %131 : vector<8x384xf32>
    %cst_40 = arith.constant 1.000000e+00 : f32
    %133 = vector.broadcast %cst_40 : f32 to vector<8x384xf32>
    %134 = arith.addf %133, %132 : vector<8x384xf32>
    %135 = arith.divf %133, %134 : vector<8x384xf32>
    %136 = vector.extract_strided_slice %135 {offsets = [0, 0], sizes = [8, 128], strides = [1, 1]} : vector<8x384xf32> to vector<8x128xf32>
    %137 = vector.extract_strided_slice %135 {offsets = [0, 128], sizes = [8, 128], strides = [1, 1]} : vector<8x384xf32> to vector<8x128xf32>
    %138 = vector.extract_strided_slice %135 {offsets = [0, 256], sizes = [8, 128], strides = [1, 1]} : vector<8x384xf32> to vector<8x128xf32>
    %139 = vector.extract_strided_slice %129 {offsets = [0, 384], sizes = [8, 128], strides = [1, 1]} : vector<8x512xf32> to vector<8x128xf32>
    %140 = math.tanh %139 : vector<8x128xf32>
    %141 = arith.mulf %137, %120 : vector<8x128xf32>
    %142 = arith.mulf %136, %140 : vector<8x128xf32>
    %143 = arith.addf %141, %142 : vector<8x128xf32>
    %144 = math.tanh %143 : vector<8x128xf32>
    %145 = arith.mulf %138, %144 : vector<8x128xf32>
    %c8_i32_41 = arith.constant 8 : i32
    %146 = arith.muli %c5_i32, %c8_i32_41 : i32
    %147 = tpu.assume_multiple %146, 8 : i32
    %148 = arith.index_cast %147 : i32 to index
    %c0_42 = arith.constant 0 : index
    %149 = vector.load %arg14[%148, %c0_42] : memref<64x128xf32, #tpu.memory_space<vmem>>, vector<8x128xf32>
    tpu.vector_store %arg14[%148, %c0_42], %145 {strides = array<i32>} : memref<64x128xf32, #tpu.memory_space<vmem>>, vector<8x128xf32>,
    %c6_i32 = arith.constant 6 : i32
    %cst_43 = arith.constant dense<0.000000e+00> : vector<8x512xf32>
    %150 = tpu.matmul %145, %33, %cst_43 {dimension_numbers = #tpu.dot_dimension_numbers<[1], [0], [0], [1], [0, 0, 1, 1], [], []>} : vector<8x128xf32>, vector<128x512xf32>, vector<8x512xf32> -> vector<8x512xf32>
    %151 = vector.broadcast %34 : vector<1x512xf32> to vector<8x512xf32>
    %152 = arith.addf %150, %151 : vector<8x512xf32>
    %153 = vector.extract_strided_slice %152 {offsets = [0, 0], sizes = [8, 384], strides = [1, 1]} : vector<8x512xf32> to vector<8x384xf32>
    %154 = arith.negf %153 : vector<8x384xf32>
    %155 = math.exp %154 : vector<8x384xf32>
    %cst_44 = arith.constant 1.000000e+00 : f32
    %156 = vector.broadcast %cst_44 : f32 to vector<8x384xf32>
    %157 = arith.addf %156, %155 : vector<8x384xf32>
    %158 = arith.divf %156, %157 : vector<8x384xf32>
    %159 = vector.extract_strided_slice %158 {offsets = [0, 0], sizes = [8, 128], strides = [1, 1]} : vector<8x384xf32> to vector<8x128xf32>
    %160 = vector.extract_strided_slice %158 {offsets = [0, 128], sizes = [8, 128], strides = [1, 1]} : vector<8x384xf32> to vector<8x128xf32>
    %161 = vector.extract_strided_slice %158 {offsets = [0, 256], sizes = [8, 128], strides = [1, 1]} : vector<8x384xf32> to vector<8x128xf32>
    %162 = vector.extract_strided_slice %152 {offsets = [0, 384], sizes = [8, 128], strides = [1, 1]} : vector<8x512xf32> to vector<8x128xf32>
    %163 = math.tanh %162 : vector<8x128xf32>
    %164 = arith.mulf %160, %143 : vector<8x128xf32>
    %165 = arith.mulf %159, %163 : vector<8x128xf32>
    %166 = arith.addf %164, %165 : vector<8x128xf32>
    %167 = math.tanh %166 : vector<8x128xf32>
    %168 = arith.mulf %161, %167 : vector<8x128xf32>
    %c8_i32_45 = arith.constant 8 : i32
    %169 = arith.muli %c6_i32, %c8_i32_45 : i32
    %170 = tpu.assume_multiple %169, 8 : i32
    %171 = arith.index_cast %170 : i32 to index
    %c0_46 = arith.constant 0 : index
    %172 = vector.load %arg14[%171, %c0_46] : memref<64x128xf32, #tpu.memory_space<vmem>>, vector<8x128xf32>
    tpu.vector_store %arg14[%171, %c0_46], %168 {strides = array<i32>} : memref<64x128xf32, #tpu.memory_space<vmem>>, vector<8x128xf32>,
    %c7_i32 = arith.constant 7 : i32
    %cst_47 = arith.constant dense<0.000000e+00> : vector<8x512xf32>
    %173 = tpu.matmul %168, %33, %cst_47 {dimension_numbers = #tpu.dot_dimension_numbers<[1], [0], [0], [1], [0, 0, 1, 1], [], []>} : vector<8x128xf32>, vector<128x512xf32>, vector<8x512xf32> -> vector<8x512xf32>
    %174 = vector.broadcast %34 : vector<1x512xf32> to vector<8x512xf32>
    %175 = arith.addf %173, %174 : vector<8x512xf32>
    %176 = vector.extract_strided_slice %175 {offsets = [0, 0], sizes = [8, 384], strides = [1, 1]} : vector<8x512xf32> to vector<8x384xf32>
    %177 = arith.negf %176 : vector<8x384xf32>
    %178 = math.exp %177 : vector<8x384xf32>
    %cst_48 = arith.constant 1.000000e+00 : f32
    %179 = vector.broadcast %cst_48 : f32 to vector<8x384xf32>
    %180 = arith.addf %179, %178 : vector<8x384xf32>
    %181 = arith.divf %179, %180 : vector<8x384xf32>
    %182 = vector.extract_strided_slice %181 {offsets = [0, 0], sizes = [8, 128], strides = [1, 1]} : vector<8x384xf32> to vector<8x128xf32>
    %183 = vector.extract_strided_slice %181 {offsets = [0, 128], sizes = [8, 128], strides = [1, 1]} : vector<8x384xf32> to vector<8x128xf32>
    %184 = vector.extract_strided_slice %181 {offsets = [0, 256], sizes = [8, 128], strides = [1, 1]} : vector<8x384xf32> to vector<8x128xf32>
    %185 = vector.extract_strided_slice %175 {offsets = [0, 384], sizes = [8, 128], strides = [1, 1]} : vector<8x512xf32> to vector<8x128xf32>
    %186 = math.tanh %185 : vector<8x128xf32>
    %187 = arith.mulf %183, %166 : vector<8x128xf32>
    %188 = arith.mulf %182, %186 : vector<8x128xf32>
    %189 = arith.addf %187, %188 : vector<8x128xf32>
    %190 = math.tanh %189 : vector<8x128xf32>
    %191 = arith.mulf %184, %190 : vector<8x128xf32>
    %c8_i32_49 = arith.constant 8 : i32
    %192 = arith.muli %c7_i32, %c8_i32_49 : i32
    %193 = tpu.assume_multiple %192, 8 : i32
    %194 = arith.index_cast %193 : i32 to index
    %c0_50 = arith.constant 0 : index
    %195 = vector.load %arg14[%194, %c0_50] : memref<64x128xf32, #tpu.memory_space<vmem>>, vector<8x128xf32>
    tpu.vector_store %arg14[%194, %c0_50], %191 {strides = array<i32>} : memref<64x128xf32, #tpu.memory_space<vmem>>, vector<8x128xf32>,
    %c7_i32_51 = arith.constant 7 : i32
    %c0_52 = arith.constant 0 : index
    %c0_53 = arith.constant 0 : index
    %196 = vector.load %arg13[%c0_52, %c0_53] : memref<8x128xf32, #tpu.memory_space<vmem>>, vector<8x128xf32>
    tpu.vector_store %arg13[%c0_52, %c0_53], %191 {strides = array<i32>} : memref<8x128xf32, #tpu.memory_space<vmem>>, vector<8x128xf32>,
    %c0_54 = arith.constant 0 : index
    %c0_55 = arith.constant 0 : index
    %197 = vector.load %arg14[%c0_54, %c0_55] : memref<64x128xf32, #tpu.memory_space<vmem>>, vector<64x128xf32>
    %c0_56 = arith.constant 0 : index
    %c0_57 = arith.constant 0 : index
    %198 = vector.load %arg10[%c0_56, %c0_57] : memref<128x128xf32, #tpu.memory_space<vmem>>, vector<128x128xf32>
    %cst_58 = arith.constant dense<0.000000e+00> : vector<64x128xf32>
    %199 = tpu.matmul %197, %198, %cst_58 {dimension_numbers = #tpu.dot_dimension_numbers<[1], [0], [0], [1], [0, 0, 1, 1], [], []>} : vector<64x128xf32>, vector<128x128xf32>, vector<64x128xf32> -> vector<64x128xf32>
    %c0_59 = arith.constant 0 : index
    %c0_60 = arith.constant 0 : index
    %200 = vector.load %arg11[%c0_59, %c0_60] : memref<1x128xf32, #tpu.memory_space<vmem>>, vector<1x128xf32>
    %201 = vector.broadcast %200 : vector<1x128xf32> to vector<64x128xf32>
    %202 = arith.addf %199, %201 : vector<64x128xf32>
    %c0_61 = arith.constant 0 : index
    %c0_62 = arith.constant 0 : index
    %203 = vector.load %arg12[%c0_61, %c0_62] : memref<64x128xf32, #tpu.memory_space<vmem>>, vector<64x128xf32>
    tpu.vector_store %arg12[%c0_61, %c0_62], %202 {strides = array<i32>} : memref<64x128xf32, #tpu.memory_space<vmem>>, vector<64x128xf32>,
    return
  }
}

</mosaic_0001>

<llo_original>
// kernel: tpu_custom_call.1
$region0: #{tpu_custom_call.1}
  #allocation0 [shape = 'u32[]', space=smem, size = 0x4, offset = 0x4, fixed_abs, tag = 'smem constant byte address 0x4 - core index']
  #allocation1 [shape = 'u32[144,128]{1,0:T(1,128)}', space=vmem, size = 0x12000, scoped, tag = 'internal scratch']
  #allocation2 [shape = 'f32[64,128]{1,0:T(8,128)}', space=vmem, size = 0x8000, scoped, tag = 'scratch operand']
  %s0 = inlined_call_operand.vmem [shape: f32[8,2], index: 0, kind: input, shape index: {}]
  %s1 = inlined_call_operand.vmem [shape: f32[8,128], index: 1, kind: input, shape index: {}]
  %s2 = inlined_call_operand.hbm [shape: f32[8,128], index: 2, kind: input, shape index: {}]
  %s3 = inlined_call_operand.hbm [shape: f32[2,64], index: 3, kind: input, shape index: {}]
  %s4 = inlined_call_operand.vmem [shape: f32[1,64], index: 4, kind: input, shape index: {}]
  %s5 = inlined_call_operand.hbm [shape: f32[64,512], index: 5, kind: input, shape index: {}]
  %s6 = inlined_call_operand.hbm [shape: f32[128,512], index: 6, kind: input, shape index: {}]
  %s7 = inlined_call_operand.vmem [shape: f32[1,512], index: 7, kind: input, shape index: {}]
  %s8 = inlined_call_operand.hbm [shape: f32[128,512], index: 8, kind: input, shape index: {}]
  %s9 = inlined_call_operand.vmem [shape: f32[1,512], index: 9, kind: input, shape index: {}]
  %s10 = inlined_call_operand.hbm [shape: f32[128,128], index: 10, kind: input, shape index: {}]
  %s11 = inlined_call_operand.vmem [shape: f32[1,128], index: 11, kind: input, shape index: {}]
  %s12 = inlined_call_operand.hbm [shape: f32[64,128], index: 12, kind: output, shape index: {0}]
  %s13 = inlined_call_operand.hbm [shape: f32[8,128], index: 13, kind: output, shape index: {1}]
  %14 = xla_tuple %s12, %s13
  %s15 = sld [smem:[#allocation0]]
  $region90: #{tpu_custom_call.1} parent=0
    _
  %s17 = ssub.s32 1, %s15
  %s18 = scalar_select 0, %s17, %s15
  $region1: #{tpu_custom_call.1} parent=0
    #allocation3 [shape = 'u8[4096]{0}', space=vmem, size = 0x1000, scoped, tag = 'input window, operand 2, single buffered']
    #allocation4 [shape = 's32[1]{0}', space=sflag, size = 0x4, scoped, tag = 'scoped memory for tpu_custom_call.1']
    #allocation5 [shape = 's32[1]{0}', space=sflag, size = 0x4, scoped, tag = 'scoped memory for tpu_custom_call.1']
    #allocation6 [shape = 'u8[1024]{0}', space=vmem, size = 0x400, scoped, tag = 'input window, operand 3, single buffered']
    #allocation7 [shape = 's32[1]{0}', space=sflag, size = 0x4, scoped, tag = 'scoped memory for tpu_custom_call.1']
    #allocation8 [shape = 'u8[131072]{0}', space=vmem, size = 0x20000, scoped, tag = 'input window, operand 5, single buffered']
    #allocation9 [shape = 'u8[262144]{0}', space=vmem, size = 0x40000, scoped, tag = 'input window, operand 6, single buffered']
    #allocation10 [shape = 's32[1]{0}', space=sflag, size = 0x4, scoped, tag = 'scoped memory for tpu_custom_call.1']
    #allocation11 [shape = 'u8[262144]{0}', space=vmem, size = 0x40000, scoped, tag = 'input window, operand 8, single buffered']
    #allocation12 [shape = 'u8[65536]{0}', space=vmem, size = 0x10000, scoped, tag = 'input window, operand 10, single buffered']
    #allocation13 [shape = 's32[1]{0}', space=sflag, size = 0x4, scoped, tag = 'scoped memory for tpu_custom_call.1']
    #allocation14 [shape = 'u8[32768]{0}', space=vmem, size = 0x8000, scoped, tag = 'output window, operand 0, single buffered']
    #allocation15 [shape = 'u8[4096]{0}', space=vmem, size = 0x1000, scoped, tag = 'output window, operand 1, single buffered']
    #allocation16 [shape = 's32[1]{0}', space=sflag, size = 0x4, scoped, tag = 'scoped memory for tpu_custom_call.1']
    %19 = vsyncpa [#allocation4], 0
    %20 = vsyncpa [#allocation7], 0
    %21 = vsyncpa [#allocation10], 0
    %22 = vsyncpa [#allocation13], 0
    %23 = vsyncpa [#allocation5], 0
    %24 = vsyncpa [#allocation16], 0
    // Predicated region
    $region2: #{tpu_custom_call.1} parent=1 // pred_check
      _
    $region3: #{tpu_custom_call.1} parent=1 // pred_check_branch
      %26 = sbr.rel (0) target = $region5
    $region4: #{tpu_custom_call.1} parent=1 // pred_region
      _
    $region5: #{tpu_custom_call.1} parent=1 // pred_fallthru
      _
    // Predicated region
    $region6: #{tpu_custom_call.1} parent=1 // pred_check
      _
    $region7: #{tpu_custom_call.1} parent=1 // pred_check_branch
      %28 = sbr.rel (0) target = $region9
    $region8: #{tpu_custom_call.1} parent=1 // pred_region
      _
    $region9: #{tpu_custom_call.1} parent=1 // pred_fallthru
      _
    // Predicated region
    $region10: #{tpu_custom_call.1} parent=1 // pred_check
      _
    $region11: #{tpu_custom_call.1} parent=1 // pred_check_branch
      %30 = sbr.rel (0) target = $region13
    $region12: #{tpu_custom_call.1} parent=1 // pred_region
      %s32 = ssub.s32 128, 128
      %33 = vsyncadd [#allocation4], %s32
      %s35 = sshll.u32 [#allocation3], 4
      %s36 = int_to_ptr.vmem [resolvable:$true] %s35
      %38 = dma.hbm_to_vmem [thread:$0]  %s2, 128, %s36, [#allocation4]
    $region13: #{tpu_custom_call.1} parent=1 // pred_fallthru
      _
    // Predicated region
    $region14: #{tpu_custom_call.1} parent=1 // pred_check
      _
    $region15: #{tpu_custom_call.1} parent=1 // pred_check_branch
      %40 = sbr.rel (0) target = $region17
    $region16: #{tpu_custom_call.1} parent=1 // pred_region
      %s42 = ssub.s32 32, 32
      %43 = vsyncadd [#allocation7], %s42
      %s45 = sshll.u32 [#allocation6], 4
      %s46 = int_to_ptr.vmem [resolvable:$true] %s45
      %48 = dma.hbm_to_vmem [thread:$0]  %s3, 32, %s46, [#allocation7]
    $region17: #{tpu_custom_call.1} parent=1 // pred_fallthru
      _
    // Predicated region
    $region18: #{tpu_custom_call.1} parent=1 // pred_check
      _
    $region19: #{tpu_custom_call.1} parent=1 // pred_check_branch
      %50 = sbr.rel (0) target = $region21
    $region20: #{tpu_custom_call.1} parent=1 // pred_region
      _
    $region21: #{tpu_custom_call.1} parent=1 // pred_fallthru
      _
    // Predicated region
    $region22: #{tpu_custom_call.1} parent=1 // pred_check
      _
    $region23: #{tpu_custom_call.1} parent=1 // pred_check_branch
      %52 = sbr.rel (0) target = $region25
    $region24: #{tpu_custom_call.1} parent=1 // pred_region
      %s54 = ssub.s32 4096, 4096
      %55 = vsyncadd [#allocation7], %s54
      %s56 = sshll.u32 [#allocation8], 4
      %s57 = int_to_ptr.vmem [resolvable:$true] %s56
      %62 = dma.hbm_to_vmem [thread:$0]  %s5, 4096, %s57, [#allocation7], 512, 512, 32
    $region25: #{tpu_custom_call.1} parent=1 // pred_fallthru
      _
    // Predicated region
    $region26: #{tpu_custom_call.1} parent=1 // pred_check
      _
    $region27: #{tpu_custom_call.1} parent=1 // pred_check_branch
      %64 = sbr.rel (0) target = $region29
    $region28: #{tpu_custom_call.1} parent=1 // pred_region
      %s66 = ssub.s32 8192, 8192
      %67 = vsyncadd [#allocation10], %s66
      %s68 = sshll.u32 [#allocation9], 4
      %s69 = int_to_ptr.vmem [resolvable:$true] %s68
      %74 = dma.hbm_to_vmem [thread:$0]  %s6, 8192, %s69, [#allocation10], 512, 512, 32
    $region29: #{tpu_custom_call.1} parent=1 // pred_fallthru
      _
    // Predicated region
    $region30: #{tpu_custom_call.1} parent=1 // pred_check
      _
    $region31: #{tpu_custom_call.1} parent=1 // pred_check_branch
      %76 = sbr.rel (0) target = $region33
    $region32: #{tpu_custom_call.1} parent=1 // pred_region
      _
    $region33: #{tpu_custom_call.1} parent=1 // pred_fallthru
      _
    // Predicated region
    $region34: #{tpu_custom_call.1} parent=1 // pred_check
      _
    $region35: #{tpu_custom_call.1} parent=1 // pred_check_branch
      %78 = sbr.rel (0) target = $region37
    $region36: #{tpu_custom_call.1} parent=1 // pred_region
      %s80 = ssub.s32 8192, 8192
      %81 = vsyncadd [#allocation10], %s80
      %s82 = sshll.u32 [#allocation11], 4
      %s83 = int_to_ptr.vmem [resolvable:$true] %s82
      %88 = dma.hbm_to_vmem [thread:$0]  %s8, 8192, %s83, [#allocation10], 512, 512, 32
    $region37: #{tpu_custom_call.1} parent=1 // pred_fallthru
      _
    // Predicated region
    $region38: #{tpu_custom_call.1} parent=1 // pred_check
      _
    $region39: #{tpu_custom_call.1} parent=1 // pred_check_branch
      %90 = sbr.rel (0) target = $region41
    $region40: #{tpu_custom_call.1} parent=1 // pred_region
      _
    $region41: #{tpu_custom_call.1} parent=1 // pred_fallthru
      _
    // Predicated region
    $region42: #{tpu_custom_call.1} parent=1 // pred_check
      _
    $region43: #{tpu_custom_call.1} parent=1 // pred_check_branch
      %92 = sbr.rel (0) target = $region45
    $region44: #{tpu_custom_call.1} parent=1 // pred_region
      %s94 = ssub.s32 2048, 2048
      %95 = vsyncadd [#allocation13], %s94
      %s96 = sshll.u32 [#allocation12], 4
      %s97 = int_to_ptr.vmem [resolvable:$true] %s96
      %102 = dma.hbm_to_vmem [thread:$0]  %s10, 2048, %s97, [#allocation13], 128, 128, 8
    $region45: #{tpu_custom_call.1} parent=1 // pred_fallthru
      _
    // Predicated region
    $region46: #{tpu_custom_call.1} parent=1 // pred_check
      _
    $region47: #{tpu_custom_call.1} parent=1 // pred_check_branch
      %104 = sbr.rel (0) target = $region49
    $region48: #{tpu_custom_call.1} parent=1 // pred_region
      _
    $region49: #{tpu_custom_call.1} parent=1 // pred_fallthru
      _
    // Predicated region
    $region50: #{tpu_custom_call.1} parent=1 // pred_check
      _
    $region51: #{tpu_custom_call.1} parent=1 // pred_check_branch
      %106 = sbr.rel (0) target = $region53
    $region52: #{tpu_custom_call.1} parent=1 // pred_region
      %107 = dma.done [#allocation4], 128
    $region53: #{tpu_custom_call.1} parent=1 // pred_fallthru
      _
    // Predicated region
    $region54: #{tpu_custom_call.1} parent=1 // pred_check
      _
    $region55: #{tpu_custom_call.1} parent=1 // pred_check_branch
      %109 = sbr.rel (0) target = $region57
    $region56: #{tpu_custom_call.1} parent=1 // pred_region
      %110 = dma.done [#allocation7], 32
    $region57: #{tpu_custom_call.1} parent=1 // pred_fallthru
      _
    // Predicated region
    $region58: #{tpu_custom_call.1} parent=1 // pred_check
      _
    $region59: #{tpu_custom_call.1} parent=1 // pred_check_branch
      %112 = sbr.rel (0) target = $region61
    $region60: #{tpu_custom_call.1} parent=1 // pred_region
      %113 = dma.done [#allocation7], 4096
    $region61: #{tpu_custom_call.1} parent=1 // pred_fallthru
      _
    // Predicated region
    $region62: #{tpu_custom_call.1} parent=1 // pred_check
      _
    $region63: #{tpu_custom_call.1} parent=1 // pred_check_branch
      %115 = sbr.rel (0) target = $region65
    $region64: #{tpu_custom_call.1} parent=1 // pred_region
      %116 = dma.done [#allocation10], 8192
    $region65: #{tpu_custom_call.1} parent=1 // pred_fallthru
      _
    // Predicated region
    $region66: #{tpu_custom_call.1} parent=1 // pred_check
      _
    $region67: #{tpu_custom_call.1} parent=1 // pred_check_branch
      %118 = sbr.rel (0) target = $region69
    $region68: #{tpu_custom_call.1} parent=1 // pred_region
      %119 = dma.done [#allocation10], 8192
    $region69: #{tpu_custom_call.1} parent=1 // pred_fallthru
      _
    // Predicated region
    $region70: #{tpu_custom_call.1} parent=1 // pred_check
      _
    $region71: #{tpu_custom_call.1} parent=1 // pred_check_branch
      %121 = sbr.rel (0) target = $region73
    $region72: #{tpu_custom_call.1} parent=1 // pred_region
      %122 = dma.done [#allocation13], 2048
    $region73: #{tpu_custom_call.1} parent=1 // pred_fallthru
      _
    %v123 = vld [vmem:[%s0] sm:$0xff]
    %v124 = vld [vmem:[#allocation6] sm:$0x3]
    %v125 = vld [vmem:[%s4] sm:$0x1]
    %v127 = vlaneseq
    %v128 = vshrl.u32 %v127, 7
    %v129 = vsub.s32 0, %v128
    %v130 = vrot.slane %v125, %v129
    %vm132 = vcmask 15360
    %v134 = vsel %vm132, %v123, 0
    %vm136 = vcmask 1041408
    %v138 = vsel %vm136, %v124, 0
    %140 = vmatprep.subr.mxu0 0.0
    %141 = vmatpush1.msra.mxu0 0.0
    %142 = vmatprep.subr.mxu0 0.0
    %143 = vmatpush1.msra.mxu0 0.0
    %144 = vmatprep.subr.mxu0 0.0
    %145 = vmatpush1.msra.mxu0 0.0
    %146 = vmatprep.subr.mxu0 0.0
    %147 = vmatpush1.msra.mxu0 0.0
    %148 = vmatprep.subr.mxu0 0.0
    %149 = vmatpush1.msra.mxu0 0.0
    %150 = vmatprep.subr.mxu0 0.0
    %151 = vmatpush1.msra.mxu0 0.0
    %152 = vmatprep.subr.mxu0 0.0
    %153 = vmatpush1.msra.mxu0 0.0
    %154 = vmatprep.subr.mxu0 0.0
    %155 = vmatpush1.msra.mxu0 0.0
    %156 = vmatprep.subr.mxu0 0.0
    %157 = vmatpush1.msra.mxu0 0.0
    %158 = vmatprep.subr.mxu0 0.0
    %159 = vmatpush1.msra.mxu0 0.0
    %160 = vmatprep.subr.mxu0 0.0
    %161 = vmatpush1.msra.mxu0 0.0
    %162 = vmatprep.subr.mxu0 0.0
    %163 = vmatpush1.msra.mxu0 0.0
    %164 = vmatprep.subr.mxu0 0.0
    %165 = vmatpush1.msra.mxu0 0.0
    %166 = vmatprep.subr.mxu0 0.0
    %167 = vmatpush1.msra.mxu0 0.0
    %168 = vmatprep.subr.mxu0 0.0
    %169 = vmatpush1.msra.mxu0 0.0
    %170 = vmatprep.subr.mxu0 0.0
    %171 = vmatpush1.msra.mxu0 %v138
    %172 = vmatprep.subr.mxu0 0.0
    %173 = vmatpush2.msra.mxu0 0.0
    %174 = vmatprep.subr.mxu0 0.0
    %175 = vmatpush2.msra.mxu0 0.0
    %176 = vmatprep.subr.mxu0 0.0
    %177 = vmatpush2.msra.mxu0 0.0
    %178 = vmatprep.subr.mxu0 0.0
    %179 = vmatpush2.msra.mxu0 0.0
    %180 = vmatprep.subr.mxu0 0.0
    %181 = vmatpush2.msra.mxu0 0.0
    %182 = vmatprep.subr.mxu0 0.0
    %183 = vmatpush2.msra.mxu0 0.0
    %184 = vmatprep.subr.mxu0 0.0
    %185 = vmatpush2.msra.mxu0 0.0
    %186 = vmatprep.subr.mxu0 0.0
    %187 = vmatpush2.msra.mxu0 0.0
    %188 = vmatprep.subr.mxu0 0.0
    %189 = vmatpush2.msra.mxu0 0.0
    %190 = vmatprep.subr.mxu0 0.0
    %191 = vmatpush2.msra.mxu0 0.0
    %192 = vmatprep.subr.mxu0 0.0
    %193 = vmatpush2.msra.mxu0 0.0
    %194 = vmatprep.subr.mxu0 0.0
    %195 = vmatpush2.msra.mxu0 0.0
    %196 = vmatprep.subr.mxu0 0.0
    %197 = vmatpush2.msra.mxu0 0.0
    %198 = vmatprep.subr.mxu0 0.0
    %199 = vmatpush2.msra.mxu0 0.0
    %200 = vmatprep.subr.mxu0 0.0
    %201 = vmatpush2.msra.mxu0 0.0
    %202 = vmatprep.subr.mxu0 0.0
    %203 = vmatpush2.msra.mxu0 0.0
    %204 = vmatprep.mubr.f32.mxu0 0.0
    %205 = vmatmul.mubr.f32.gmra.mxu0 %v134
    %v206 = vpop.f32.mrf.mxu0
    %v207 = vadd.f32 %v130, %v206
    %v208 = vpop.f32.mrf.mxu0
    %209 = vdwg.mxu0
    %v210 = vld [vmem:[#allocation8] sm:$0xff]
    %v211 = vld [vmem:[#allocation8 + $0x8] sm:$0xff]
    %v212 = vld [vmem:[#allocation8 + $0x10] sm:$0xff]
    %v213 = vld [vmem:[#allocation8 + $0x18] sm:$0xff]
    %v214 = vld [vmem:[#allocation8 + $0x20] sm:$0xff]
    %v215 = vld [vmem:[#allocation8 + $0x28] sm:$0xff]
    %v216 = vld [vmem:[#allocation8 + $0x30] sm:$0xff]
    %v217 = vld [vmem:[#allocation8 + $0x38] sm:$0xff]
    %v218 = vld [vmem:[#allocation8 + $0x40] sm:$0xff]
    %v219 = vld [vmem:[#allocation8 + $0x48] sm:$0xff]
    %v220 = vld [vmem:[#allocation8 + $0x50] sm:$0xff]
    %v221 = vld [vmem:[#allocation8 + $0x58] sm:$0xff]
    %v222 = vld [vmem:[#allocation8 + $0x60] sm:$0xff]
    %v223 = vld [vmem:[#allocation8 + $0x68] sm:$0xff]
    %v224 = vld [vmem:[#allocation8 + $0x70] sm:$0xff]
    %v225 = vld [vmem:[#allocation8 + $0x78] sm:$0xff]
    %v226 = vld [vmem:[#allocation8 + $0x80] sm:$0xff]
    %v227 = vld [vmem:[#allocation8 + $0x88] sm:$0xff]
    %v228 = vld [vmem:[#allocation8 + $0x90] sm:$0xff]
    %v229 = vld [vmem:[#allocation8 + $0x98] sm:$0xff]
    %v230 = vld [vmem:[#allocation8 + $0xa0] sm:$0xff]
    %v231 = vld [vmem:[#allocation8 + $0xa8] sm:$0xff]
    %v232 = vld [vmem:[#allocation8 + $0xb0] sm:$0xff]
    %v233 = vld [vmem:[#allocation8 + $0xb8] sm:$0xff]
    %v234 = vld [vmem:[#allocation8 + $0xc0] sm:$0xff]
    %v235 = vld [vmem:[#allocation8 + $0xc8] sm:$0xff]
    %v236 = vld [vmem:[#allocation8 + $0xd0] sm:$0xff]
    %v237 = vld [vmem:[#allocation8 + $0xd8] sm:$0xff]
    %v238 = vld [vmem:[#allocation8 + $0xe0] sm:$0xff]
    %v239 = vld [vmem:[#allocation8 + $0xe8] sm:$0xff]
    %v240 = vld [vmem:[#allocation8 + $0xf0] sm:$0xff]
    %v241 = vld [vmem:[#allocation8 + $0xf8] sm:$0xff]
    %v242 = vld [vmem:[%s1] sm:$0xff]
    %v243 = vld [vmem:[#allocation9] sm:$0xff]
    %v244 = vld [vmem:[#allocation9 + $0x8] sm:$0xff]
    %v245 = vld [vmem:[#allocation9 + $0x10] sm:$0xff]
    %v246 = vld [vmem:[#allocation9 + $0x18] sm:$0xff]
    %v247 = vld [vmem:[#allocation9 + $0x20] sm:$0xff]
    %v248 = vld [vmem:[#allocation9 + $0x28] sm:$0xff]
    %v249 = vld [vmem:[#allocation9 + $0x30] sm:$0xff]
    %v250 = vld [vmem:[#allocation9 + $0x38] sm:$0xff]
    %v251 = vld [vmem:[#allocation9 + $0x40] sm:$0xff]
    %v252 = vld [vmem:[#allocation9 + $0x48] sm:$0xff]
    %v253 = vld [vmem:[#allocation9 + $0x50] sm:$0xff]
    %v254 = vld [vmem:[#allocation9 + $0x58] sm:$0xff]
    %v255 = vld [vmem:[#allocation9 + $0x60] sm:$0xff]
    %v256 = vld [vmem:[#allocation9 + $0x68] sm:$0xff]
    %v257 = vld [vmem:[#allocation9 + $0x70] sm:$0xff]
    %v258 = vld [vmem:[#allocation9 + $0x78] sm:$0xff]
    %v259 = vld [vmem:[#allocation9 + $0x80] sm:$0xff]
    %v260 = vld [vmem:[#allocation9 + $0x88] sm:$0xff]
    %v261 = vld [vmem:[#allocation9 + $0x90] sm:$0xff]
    %v262 = vld [vmem:[#allocation9 + $0x98] sm:$0xff]
    %v263 = vld [vmem:[#allocation9 + $0xa0] sm:$0xff]
    %v264 = vld [vmem:[#allocation9 + $0xa8] sm:$0xff]
    %v265 = vld [vmem:[#allocation9 + $0xb0] sm:$0xff]
    %v266 = vld [vmem:[#allocation9 + $0xb8] sm:$0xff]
    %v267 = vld [vmem:[#allocation9 + $0xc0] sm:$0xff]
    %v268 = vld [vmem:[#allocation9 + $0xc8] sm:$0xff]
    %v269 = vld [vmem:[#allocation9 + $0xd0] sm:$0xff]
    %v270 = vld [vmem:[#allocation9 + $0xd8] sm:$0xff]
    %v271 = vld [vmem:[#allocation9 + $0xe0] sm:$0xff]
    %v272 = vld [vmem:[#allocation9 + $0xe8] sm:$0xff]
    %v273 = vld [vmem:[#allocation9 + $0xf0] sm:$0xff]
    %v274 = vld [vmem:[#allocation9 + $0xf8] sm:$0xff]
    %v275 = vld [vmem:[#allocation9 + $0x100] sm:$0xff]
    %v276 = vld [vmem:[#allocation9 + $0x108] sm:$0xff]
    %v277 = vld [vmem:[#allocation9 + $0x110] sm:$0xff]
    %v278 = vld [vmem:[#allocation9 + $0x118] sm:$0xff]
    %v279 = vld [vmem:[#allocation9 + $0x120] sm:$0xff]
    %v280 = vld [vmem:[#allocation9 + $0x128] sm:$0xff]
    %v281 = vld [vmem:[#allocation9 + $0x130] sm:$0xff]
    %v282 = vld [vmem:[#allocation9 + $0x138] sm:$0xff]
    %v283 = vld [vmem:[#allocation9 + $0x140] sm:$0xff]
    %v284 = vld [vmem:[#allocation9 + $0x148] sm:$0xff]
    %v285 = vld [vmem:[#allocation9 + $0x150] sm:$0xff]
    %v286 = vld [vmem:[#allocation9 + $0x158] sm:$0xff]
    %v287 = vld [vmem:[#allocation9 + $0x160] sm:$0xff]
    %v288 = vld [vmem:[#allocation9 + $0x168] sm:$0xff]
    %v289 = vld [vmem:[#allocation9 + $0x170] sm:$0xff]
    %v290 = vld [vmem:[#allocation9 + $0x178] sm:$0xff]
    %v291 = vld [vmem:[#allocation9 + $0x180] sm:$0xff]
    %v292 = vld [vmem:[#allocation9 + $0x188] sm:$0xff]
    %v293 = vld [vmem:[#allocation9 + $0x190] sm:$0xff]
    %v294 = vld [vmem:[#allocation9 + $0x198] sm:$0xff]
    %v295 = vld [vmem:[#allocation9 + $0x1a0] sm:$0xff]
    %v296 = vld [vmem:[#allocation9 + $0x1a8] sm:$0xff]
    %v297 = vld [vmem:[#allocation9 + $0x1b0] sm:$0xff]
    %v298 = vld [vmem:[#allocation9 + $0x1b8] sm:$0xff]
    %v299 = vld [vmem:[#allocation9 + $0x1c0] sm:$0xff]
    %v300 = vld [vmem:[#allocation9 + $0x1c8] sm:$0xff]
    %v301 = vld [vmem:[#allocation9 + $0x1d0] sm:$0xff]
    %v302 = vld [vmem:[#allocation9 + $0x1d8] sm:$0xff]
    %v303 = vld [vmem:[#allocation9 + $0x1e0] sm:$0xff]
    %v304 = vld [vmem:[#allocation9 + $0x1e8] sm:$0xff]
    %v305 = vld [vmem:[#allocation9 + $0x1f0] sm:$0xff]
    %v306 = vld [vmem:[#allocation9 + $0x1f8] sm:$0xff]
    %307 = vmatprep.subr.mxu0 %v304
    %308 = vmatpush1.msra.mxu0 %v303
    %309 = vmatprep.subr.mxu0 %v300
    %310 = vmatpush1.msra.mxu0 %v299
    %311 = vmatprep.subr.mxu0 %v296
    %312 = vmatpush1.msra.mxu0 %v295
    %313 = vmatprep.subr.mxu0 %v292
    %314 = vmatpush1.msra.mxu0 %v291
    %315 = vmatprep.subr.mxu0 %v288
    %316 = vmatpush1.msra.mxu0 %v287
    %317 = vmatprep.subr.mxu0 %v284
    %318 = vmatpush1.msra.mxu0 %v283
    %319 = vmatprep.subr.mxu0 %v280
    %320 = vmatpush1.msra.mxu0 %v279
    %321 = vmatprep.subr.mxu0 %v276
    %322 = vmatpush1.msra.mxu0 %v275
    %323 = vmatprep.subr.mxu0 %v272
    %324 = vmatpush1.msra.mxu0 %v271
    %325 = vmatprep.subr.mxu0 %v268
    %326 = vmatpush1.msra.mxu0 %v267
    %327 = vmatprep.subr.mxu0 %v264
    %328 = vmatpush1.msra.mxu0 %v263
    %329 = vmatprep.subr.mxu0 %v260
    %330 = vmatpush1.msra.mxu0 %v259
    %331 = vmatprep.subr.mxu0 %v256
    %332 = vmatpush1.msra.mxu0 %v255
    %333 = vmatprep.subr.mxu0 %v252
    %334 = vmatpush1.msra.mxu0 %v251
    %335 = vmatprep.subr.mxu0 %v248
    %336 = vmatpush1.msra.mxu0 %v247
    %337 = vmatprep.subr.mxu0 %v244
    %338 = vmatpush1.msra.mxu0 %v243
    %339 = vmatprep.subr.mxu0 0.0
    %340 = vmatpush2.msra.mxu0 0.0
    %341 = vmatprep.subr.mxu0 0.0
    %342 = vmatpush2.msra.mxu0 0.0
    %343 = vmatprep.subr.mxu0 0.0
    %344 = vmatpush2.msra.mxu0 0.0
    %345 = vmatprep.subr.mxu0 0.0
    %346 = vmatpush2.msra.mxu0 0.0
    %347 = vmatprep.subr.mxu0 0.0
    %348 = vmatpush2.msra.mxu0 0.0
    %349 = vmatprep.subr.mxu0 0.0
    %350 = vmatpush2.msra.mxu0 0.0
    %351 = vmatprep.subr.mxu0 0.0
    %352 = vmatpush2.msra.mxu0 0.0
    %353 = vmatprep.subr.mxu0 0.0
    %354 = vmatpush2.msra.mxu0 0.0
    %355 = vmatprep.subr.mxu0 0.0
    %356 = vmatpush2.msra.mxu0 0.0
    %357 = vmatprep.subr.mxu0 0.0
    %358 = vmatpush2.msra.mxu0 0.0
    %359 = vmatprep.subr.mxu0 0.0
    %360 = vmatpush2.msra.mxu0 0.0
    %361 = vmatprep.subr.mxu0 0.0
    %362 = vmatpush2.msra.mxu0 0.0
    %363 = vmatprep.subr.mxu0 0.0
    %364 = vmatpush2.msra.mxu0 0.0
    %365 = vmatprep.subr.mxu0 0.0
    %366 = vmatpush2.msra.mxu0 0.0
    %367 = vmatprep.subr.mxu0 0.0
    %368 = vmatpush2.msra.mxu0 0.0
    %369 = vmatprep.subr.mxu0 0.0
    %370 = vmatpush2.msra.mxu0 0.0
    %371 = vmatprep.mubr.f32.mxu0 0.0
    %372 = vmatmul.mubr.f32.gmra.mxu0 %v242
    %v373 = vpop.f32.mrf.mxu0
    %v374 = vadd.f32 0.0, %v373
    %v375 = vpop.f32.mrf.mxu0
    %v376 = vadd.f32 0.0, %v375
    %377 = vdwg.mxu0
    %378 = vmatprep.subr.mxu0 %v306
    %379 = vmatpush1.msra.mxu0 %v305
    %380 = vmatprep.subr.mxu0 %v302
    %381 = vmatpush1.msra.mxu0 %v301
    %382 = vmatprep.subr.mxu0 %v298
    %383 = vmatpush1.msra.mxu0 %v297
    %384 = vmatprep.subr.mxu0 %v294
    %385 = vmatpush1.msra.mxu0 %v293
    %386 = vmatprep.subr.mxu0 %v290
    %387 = vmatpush1.msra.mxu0 %v289
    %388 = vmatprep.subr.mxu0 %v286
    %389 = vmatpush1.msra.mxu0 %v285
    %390 = vmatprep.subr.mxu0 %v282
    %391 = vmatpush1.msra.mxu0 %v281
    %392 = vmatprep.subr.mxu0 %v278
    %393 = vmatpush1.msra.mxu0 %v277
    %394 = vmatprep.subr.mxu0 %v274
    %395 = vmatpush1.msra.mxu0 %v273
    %396 = vmatprep.subr.mxu0 %v270
    %397 = vmatpush1.msra.mxu0 %v269
    %398 = vmatprep.subr.mxu0 %v266
    %399 = vmatpush1.msra.mxu0 %v265
    %400 = vmatprep.subr.mxu0 %v262
    %401 = vmatpush1.msra.mxu0 %v261
    %402 = vmatprep.subr.mxu0 %v258
    %403 = vmatpush1.msra.mxu0 %v257
    %404 = vmatprep.subr.mxu0 %v254
    %405 = vmatpush1.msra.mxu0 %v253
    %406 = vmatprep.subr.mxu0 %v250
    %407 = vmatpush1.msra.mxu0 %v249
    %408 = vmatprep.subr.mxu0 %v246
    %409 = vmatpush1.msra.mxu0 %v245
    %410 = vmatprep.subr.mxu0 0.0
    %411 = vmatpush2.msra.mxu0 0.0
    %412 = vmatprep.subr.mxu0 0.0
    %413 = vmatpush2.msra.mxu0 0.0
    %414 = vmatprep.subr.mxu0 0.0
    %415 = vmatpush2.msra.mxu0 0.0
    %416 = vmatprep.subr.mxu0 0.0
    %417 = vmatpush2.msra.mxu0 0.0
    %418 = vmatprep.subr.mxu0 0.0
    %419 = vmatpush2.msra.mxu0 0.0
    %420 = vmatprep.subr.mxu0 0.0
    %421 = vmatpush2.msra.mxu0 0.0
    %422 = vmatprep.subr.mxu0 0.0
    %423 = vmatpush2.msra.mxu0 0.0
    %424 = vmatprep.subr.mxu0 0.0
    %425 = vmatpush2.msra.mxu0 0.0
    %426 = vmatprep.subr.mxu0 0.0
    %427 = vmatpush2.msra.mxu0 0.0
    %428 = vmatprep.subr.mxu0 0.0
    %429 = vmatpush2.msra.mxu0 0.0
    %430 = vmatprep.subr.mxu0 0.0
    %431 = vmatpush2.msra.mxu0 0.0
    %432 = vmatprep.subr.mxu0 0.0
    %433 = vmatpush2.msra.mxu0 0.0
    %434 = vmatprep.subr.mxu0 0.0
    %435 = vmatpush2.msra.mxu0 0.0
    %436 = vmatprep.subr.mxu0 0.0
    %437 = vmatpush2.msra.mxu0 0.0
    %438 = vmatprep.subr.mxu0 0.0
    %439 = vmatpush2.msra.mxu0 0.0
    %440 = vmatprep.subr.mxu0 0.0
    %441 = vmatpush2.msra.mxu0 0.0
    %442 = vmatprep.mubr.f32.mxu0 0.0
    %443 = vmatmul.mubr.f32.gmra.mxu0 %v242
    %v444 = vpop.f32.mrf.mxu0
    %v445 = vadd.f32 0.0, %v444
    %v446 = vpop.f32.mrf.mxu0
    %v447 = vadd.f32 0.0, %v446
    %448 = vdwg.mxu0
    %vm449 = vcmask 523264
    %v451 = vsel %vm449, %v207, 0
    %453 = vmatprep.subr.mxu0 0.0
    %454 = vmatpush1.msra.mxu0 0.0
    %455 = vmatprep.subr.mxu0 0.0
    %456 = vmatpush1.msra.mxu0 0.0
    %457 = vmatprep.subr.mxu0 0.0
    %458 = vmatpush1.msra.mxu0 0.0
    %459 = vmatprep.subr.mxu0 0.0
    %460 = vmatpush1.msra.mxu0 0.0
    %461 = vmatprep.subr.mxu0 0.0
    %462 = vmatpush1.msra.mxu0 0.0
    %463 = vmatprep.subr.mxu0 0.0
    %464 = vmatpush1.msra.mxu0 0.0
    %465 = vmatprep.subr.mxu0 0.0
    %466 = vmatpush1.msra.mxu0 0.0
    %467 = vmatprep.subr.mxu0 0.0
    %468 = vmatpush1.msra.mxu0 0.0
    %469 = vmatprep.subr.mxu0 %v239
    %470 = vmatpush1.msra.mxu0 %v238
    %471 = vmatprep.subr.mxu0 %v235
    %472 = vmatpush1.msra.mxu0 %v234
    %473 = vmatprep.subr.mxu0 %v231
    %474 = vmatpush1.msra.mxu0 %v230
    %475 = vmatprep.subr.mxu0 %v227
    %476 = vmatpush1.msra.mxu0 %v226
    %477 = vmatprep.subr.mxu0 %v223
    %478 = vmatpush1.msra.mxu0 %v222
    %479 = vmatprep.subr.mxu0 %v219
    %480 = vmatpush1.msra.mxu0 %v218
    %481 = vmatprep.subr.mxu0 %v215
    %482 = vmatpush1.msra.mxu0 %v214
    %483 = vmatprep.subr.mxu0 %v211
    %484 = vmatpush1.msra.mxu0 %v210
    %485 = vmatprep.subr.mxu0 0.0
    %486 = vmatpush2.msra.mxu0 0.0
    %487 = vmatprep.subr.mxu0 0.0
    %488 = vmatpush2.msra.mxu0 0.0
    %489 = vmatprep.subr.mxu0 0.0
    %490 = vmatpush2.msra.mxu0 0.0
    %491 = vmatprep.subr.mxu0 0.0
    %492 = vmatpush2.msra.mxu0 0.0
    %493 = vmatprep.subr.mxu0 0.0
    %494 = vmatpush2.msra.mxu0 0.0
    %495 = vmatprep.subr.mxu0 0.0
    %496 = vmatpush2.msra.mxu0 0.0
    %497 = vmatprep.subr.mxu0 0.0
    %498 = vmatpush2.msra.mxu0 0.0
    %499 = vmatprep.subr.mxu0 0.0
    %500 = vmatpush2.msra.mxu0 0.0
    %501 = vmatprep.subr.mxu0 0.0
    %502 = vmatpush2.msra.mxu0 0.0
    %503 = vmatprep.subr.mxu0 0.0
    %504 = vmatpush2.msra.mxu0 0.0
    %505 = vmatprep.subr.mxu0 0.0
    %506 = vmatpush2.msra.mxu0 0.0
    %507 = vmatprep.subr.mxu0 0.0
    %508 = vmatpush2.msra.mxu0 0.0
    %509 = vmatprep.subr.mxu0 0.0
    %510 = vmatpush2.msra.mxu0 0.0
    %511 = vmatprep.subr.mxu0 0.0
    %512 = vmatpush2.msra.mxu0 0.0
    %513 = vmatprep.subr.mxu0 0.0
    %514 = vmatpush2.msra.mxu0 0.0
    %515 = vmatprep.subr.mxu0 0.0
    %516 = vmatpush2.msra.mxu0 0.0
    %517 = vmatprep.mubr.f32.mxu0 0.0
    %518 = vmatmul.mubr.f32.gmra.mxu0 %v451
    %v519 = vpop.f32.mrf.mxu0
    %v520 = vadd.f32 %v374, %v519
    %v521 = vpop.f32.mrf.mxu0
    %v522 = vadd.f32 %v376, %v521
    %523 = vdwg.mxu0
    %524 = vmatprep.subr.mxu0 0.0
    %525 = vmatpush1.msra.mxu0 0.0
    %526 = vmatprep.subr.mxu0 0.0
    %527 = vmatpush1.msra.mxu0 0.0
    %528 = vmatprep.subr.mxu0 0.0
    %529 = vmatpush1.msra.mxu0 0.0
    %530 = vmatprep.subr.mxu0 0.0
    %531 = vmatpush1.msra.mxu0 0.0
    %532 = vmatprep.subr.mxu0 0.0
    %533 = vmatpush1.msra.mxu0 0.0
    %534 = vmatprep.subr.mxu0 0.0
    %535 = vmatpush1.msra.mxu0 0.0
    %536 = vmatprep.subr.mxu0 0.0
    %537 = vmatpush1.msra.mxu0 0.0
    %538 = vmatprep.subr.mxu0 0.0
    %539 = vmatpush1.msra.mxu0 0.0
    %540 = vmatprep.subr.mxu0 %v241
    %541 = vmatpush1.msra.mxu0 %v240
    %542 = vmatprep.subr.mxu0 %v237
    %543 = vmatpush1.msra.mxu0 %v236
    %544 = vmatprep.subr.mxu0 %v233
    %545 = vmatpush1.msra.mxu0 %v232
    %546 = vmatprep.subr.mxu0 %v229
    %547 = vmatpush1.msra.mxu0 %v228
    %548 = vmatprep.subr.mxu0 %v225
    %549 = vmatpush1.msra.mxu0 %v224
    %550 = vmatprep.subr.mxu0 %v221
    %551 = vmatpush1.msra.mxu0 %v220
    %552 = vmatprep.subr.mxu0 %v217
    %553 = vmatpush1.msra.mxu0 %v216
    %554 = vmatprep.subr.mxu0 %v213
    %555 = vmatpush1.msra.mxu0 %v212
    %556 = vmatprep.subr.mxu0 0.0
    %557 = vmatpush2.msra.mxu0 0.0
    %558 = vmatprep.subr.mxu0 0.0
    %559 = vmatpush2.msra.mxu0 0.0
    %560 = vmatprep.subr.mxu0 0.0
    %561 = vmatpush2.msra.mxu0 0.0
    %562 = vmatprep.subr.mxu0 0.0
    %563 = vmatpush2.msra.mxu0 0.0
    %564 = vmatprep.subr.mxu0 0.0
    %565 = vmatpush2.msra.mxu0 0.0
    %566 = vmatprep.subr.mxu0 0.0
    %567 = vmatpush2.msra.mxu0 0.0
    %568 = vmatprep.subr.mxu0 0.0
    %569 = vmatpush2.msra.mxu0 0.0
    %570 = vmatprep.subr.mxu0 0.0
    %571 = vmatpush2.msra.mxu0 0.0
    %572 = vmatprep.subr.mxu0 0.0
    %573 = vmatpush2.msra.mxu0 0.0
    %574 = vmatprep.subr.mxu0 0.0
    %575 = vmatpush2.msra.mxu0 0.0
    %576 = vmatprep.subr.mxu0 0.0
    %577 = vmatpush2.msra.mxu0 0.0
    %578 = vmatprep.subr.mxu0 0.0
    %579 = vmatpush2.msra.mxu0 0.0
    %580 = vmatprep.subr.mxu0 0.0
    %581 = vmatpush2.msra.mxu0 0.0
    %582 = vmatprep.subr.mxu0 0.0
    %583 = vmatpush2.msra.mxu0 0.0
    %584 = vmatprep.subr.mxu0 0.0
    %585 = vmatpush2.msra.mxu0 0.0
    %586 = vmatprep.subr.mxu0 0.0
    %587 = vmatpush2.msra.mxu0 0.0
    %588 = vmatprep.mubr.f32.mxu0 0.0
    %589 = vmatmul.mubr.f32.gmra.mxu0 %v451
    %v590 = vpop.f32.mrf.mxu0
    %v591 = vadd.f32 %v445, %v590
    %v592 = vpop.f32.mrf.mxu0
    %v593 = vadd.f32 %v447, %v592
    %594 = vdwg.mxu0
    %v595 = vld [vmem:[%s7] sm:$0xf]
    %v597 = vlaneseq
    %v598 = vshrl.u32 %v597, 7
    %v599 = vsub.s32 0, %v598
    %v600 = vrot.slane %v595, %v599
    %v601 = vlaneseq
    %v602 = vshrl.u32 %v601, 7
    %v603 = vsub.s32 1, %v602
    %v604 = vrot.slane %v595, %v603
    %v605 = vlaneseq
    %v606 = vshrl.u32 %v605, 7
    %v607 = vsub.s32 2, %v606
    %v608 = vrot.slane %v595, %v607
    %v609 = vlaneseq
    %v610 = vshrl.u32 %v609, 7
    %v611 = vsub.s32 3, %v610
    %v612 = vrot.slane %v595, %v611
    %v617 = vadd.f32 %v520, %v600
    %v618 = vadd.f32 %v522, %v604
    %v619 = vadd.f32 %v591, %v608
    %v620 = vadd.f32 %v593, %v612
    %v621 = vld [vmem:[#allocation3] sm:$0xff]
    %v622 = vxor.u32 %v617, 2147483648
    %v623 = vxor.u32 %v618, 2147483648
    %v624 = vxor.u32 %v619, 2147483648
    %v625 = vmul.f32 %v622, 1.442695
    %v626 = vpow.pop %v625
    %v627 = vmul.f32 %v623, 1.442695
    %v628 = vpow.pop %v627
    %v629 = vmul.f32 %v624, 1.442695
    %v630 = vpow.pop %v629
    %v631 = vadd.f32 %v626, 1.0
    %v632 = vadd.f32 %v628, 1.0
    %v633 = vadd.f32 %v630, 1.0
    %v634 = vrcp.pop %v631
    %v635 = vmul.f32 1.0, %v634
    %v636 = vrcp.pop %v632
    %v637 = vmul.f32 1.0, %v636
    %v638 = vrcp.pop %v633
    %v639 = vmul.f32 1.0, %v638
    %v640 = vtanh.pop %v620
    %v641 = vmul.f32 %v637, %v621
    %v642 = vmul.f32 %v635, %v640
    %v643 = vadd.f32 %v641, %v642
    %v644 = vtanh.pop %v643
    %v645 = vmul.f32 %v639, %v644
    %646 = vst [vmem:[#allocation2] sm:$0xff] %v645
    %v647 = vld [vmem:[#allocation11] sm:$0xff]
    %v648 = vld [vmem:[#allocation11 + $0x8] sm:$0xff]
    %v649 = vld [vmem:[#allocation11 + $0x10] sm:$0xff]
    %v650 = vld [vmem:[#allocation11 + $0x18] sm:$0xff]
    %v651 = vld [vmem:[#allocation11 + $0x20] sm:$0xff]
    %v652 = vld [vmem:[#allocation11 + $0x28] sm:$0xff]
    %v653 = vld [vmem:[#allocation11 + $0x30] sm:$0xff]
    %v654 = vld [vmem:[#allocation11 + $0x38] sm:$0xff]
    %v655 = vld [vmem:[#allocation11 + $0x40] sm:$0xff]
    %v656 = vld [vmem:[#allocation11 + $0x48] sm:$0xff]
    %v657 = vld [vmem:[#allocation11 + $0x50] sm:$0xff]
    %v658 = vld [vmem:[#allocation11 + $0x58] sm:$0xff]
    %v659 = vld [vmem:[#allocation11 + $0x60] sm:$0xff]
    %v660 = vld [vmem:[#allocation11 + $0x68] sm:$0xff]
    %v661 = vld [vmem:[#allocation11 + $0x70] sm:$0xff]
    %v662 = vld [vmem:[#allocation11 + $0x78] sm:$0xff]
    %v663 = vld [vmem:[#allocation11 + $0x80] sm:$0xff]
    %v664 = vld [vmem:[#allocation11 + $0x88] sm:$0xff]
    %v665 = vld [vmem:[#allocation11 + $0x90] sm:$0xff]
    %v666 = vld [vmem:[#allocation11 + $0x98] sm:$0xff]
    %v667 = vld [vmem:[#allocation11 + $0xa0] sm:$0xff]
    %v668 = vld [vmem:[#allocation11 + $0xa8] sm:$0xff]
    %v669 = vld [vmem:[#allocation11 + $0xb0] sm:$0xff]
    %v670 = vld [vmem:[#allocation11 + $0xb8] sm:$0xff]
    %v671 = vld [vmem:[#allocation11 + $0xc0] sm:$0xff]
    %v672 = vld [vmem:[#allocation11 + $0xc8] sm:$0xff]
    %v673 = vld [vmem:[#allocation11 + $0xd0] sm:$0xff]
    %v674 = vld [vmem:[#allocation11 + $0xd8] sm:$0xff]
    %v675 = vld [vmem:[#allocation11 + $0xe0] sm:$0xff]
    %v676 = vld [vmem:[#allocation11 + $0xe8] sm:$0xff]
    %v677 = vld [vmem:[#allocation11 + $0xf0] sm:$0xff]
    %v678 = vld [vmem:[#allocation11 + $0xf8] sm:$0xff]
    %v679 = vld [vmem:[#allocation11 + $0x100] sm:$0xff]
    %v680 = vld [vmem:[#allocation11 + $0x108] sm:$0xff]
    %v681 = vld [vmem:[#allocation11 + $0x110] sm:$0xff]
    %v682 = vld [vmem:[#allocation11 + $0x118] sm:$0xff]
    %v683 = vld [vmem:[#allocation11 + $0x120] sm:$0xff]
    %v684 = vld [vmem:[#allocation11 + $0x128] sm:$0xff]
    %v685 = vld [vmem:[#allocation11 + $0x130] sm:$0xff]
    %v686 = vld [vmem:[#allocation11 + $0x138] sm:$0xff]
    %v687 = vld [vmem:[#allocation11 + $0x140] sm:$0xff]
    %v688 = vld [vmem:[#allocation11 + $0x148] sm:$0xff]
    %v689 = vld [vmem:[#allocation11 + $0x150] sm:$0xff]
    %v690 = vld [vmem:[#allocation11 + $0x158] sm:$0xff]
    %v691 = vld [vmem:[#allocation11 + $0x160] sm:$0xff]
    %v692 = vld [vmem:[#allocation11 + $0x168] sm:$0xff]
    %v693 = vld [vmem:[#allocation11 + $0x170] sm:$0xff]
    %v694 = vld [vmem:[#allocation11 + $0x178] sm:$0xff]
    %v695 = vld [vmem:[#allocation11 + $0x180] sm:$0xff]
    %v696 = vld [vmem:[#allocation11 + $0x188] sm:$0xff]
    %v697 = vld [vmem:[#allocation11 + $0x190] sm:$0xff]
    %v698 = vld [vmem:[#allocation11 + $0x198] sm:$0xff]
    %v699 = vld [vmem:[#allocation11 + $0x1a0] sm:$0xff]
    %v700 = vld [vmem:[#allocation11 + $0x1a8] sm:$0xff]
    %v701 = vld [vmem:[#allocation11 + $0x1b0] sm:$0xff]
    %v702 = vld [vmem:[#allocation11 + $0x1b8] sm:$0xff]
    %v703 = vld [vmem:[#allocation11 + $0x1c0] sm:$0xff]
    %v704 = vld [vmem:[#allocation11 + $0x1c8] sm:$0xff]
    %v705 = vld [vmem:[#allocation11 + $0x1d0] sm:$0xff]
    %v706 = vld [vmem:[#allocation11 + $0x1d8] sm:$0xff]
    %v707 = vld [vmem:[#allocation11 + $0x1e0] sm:$0xff]
    %v708 = vld [vmem:[#allocation11 + $0x1e8] sm:$0xff]
    %v709 = vld [vmem:[#allocation11 + $0x1f0] sm:$0xff]
    %v710 = vld [vmem:[#allocation11 + $0x1f8] sm:$0xff]
    %v711 = vld [vmem:[%s9] sm:$0xf]
    %v713 = vlaneseq
    %v714 = vshrl.u32 %v713, 7
    %v715 = vsub.s32 0, %v714
    %v716 = vrot.slane %v711, %v715
    %v717 = vlaneseq
    %v718 = vshrl.u32 %v717, 7
    %v719 = vsub.s32 1, %v718
    %v720 = vrot.slane %v711, %v719
    %v721 = vlaneseq
    %v722 = vshrl.u32 %v721, 7
    %v723 = vsub.s32 2, %v722
    %v724 = vrot.slane %v711, %v723
    %v725 = vlaneseq
    %v726 = vshrl.u32 %v725, 7
    %v727 = vsub.s32 3, %v726
    %v728 = vrot.slane %v711, %v727
    %733 = vmatprep.subr.mxu0 %v708
    %734 = vmatpush1.msra.mxu0 %v707
    %735 = vmatprep.subr.mxu0 %v704
    %736 = vmatpush1.msra.mxu0 %v703
    %737 = vmatprep.subr.mxu0 %v700
    %738 = vmatpush1.msra.mxu0 %v699
    %739 = vmatprep.subr.mxu0 %v696
    %740 = vmatpush1.msra.mxu0 %v695
    %741 = vmatprep.subr.mxu0 %v692
    %742 = vmatpush1.msra.mxu0 %v691
    %743 = vmatprep.subr.mxu0 %v688
    %744 = vmatpush1.msra.mxu0 %v687
    %745 = vmatprep.subr.mxu0 %v684
    %746 = vmatpush1.msra.mxu0 %v683
    %747 = vmatprep.subr.mxu0 %v680
    %748 = vmatpush1.msra.mxu0 %v679
    %749 = vmatprep.subr.mxu0 %v676
    %750 = vmatpush1.msra.mxu0 %v675
    %751 = vmatprep.subr.mxu0 %v672
    %752 = vmatpush1.msra.mxu0 %v671
    %753 = vmatprep.subr.mxu0 %v668
    %754 = vmatpush1.msra.mxu0 %v667
    %755 = vmatprep.subr.mxu0 %v664
    %756 = vmatpush1.msra.mxu0 %v663
    %757 = vmatprep.subr.mxu0 %v660
    %758 = vmatpush1.msra.mxu0 %v659
    %759 = vmatprep.subr.mxu0 %v656
    %760 = vmatpush1.msra.mxu0 %v655
    %761 = vmatprep.subr.mxu0 %v652
    %762 = vmatpush1.msra.mxu0 %v651
    %763 = vmatprep.subr.mxu0 %v648
    %764 = vmatpush1.msra.mxu0 %v647
    %765 = vmatprep.subr.mxu0 0.0
    %766 = vmatpush2.msra.mxu0 0.0
    %767 = vmatprep.subr.mxu0 0.0
    %768 = vmatpush2.msra.mxu0 0.0
    %769 = vmatprep.subr.mxu0 0.0
    %770 = vmatpush2.msra.mxu0 0.0
    %771 = vmatprep.subr.mxu0 0.0
    %772 = vmatpush2.msra.mxu0 0.0
    %773 = vmatprep.subr.mxu0 0.0
    %774 = vmatpush2.msra.mxu0 0.0
    %775 = vmatprep.subr.mxu0 0.0
    %776 = vmatpush2.msra.mxu0 0.0
    %777 = vmatprep.subr.mxu0 0.0
    %778 = vmatpush2.msra.mxu0 0.0
    %779 = vmatprep.subr.mxu0 0.0
    %780 = vmatpush2.msra.mxu0 0.0
    %781 = vmatprep.subr.mxu0 0.0
    %782 = vmatpush2.msra.mxu0 0.0
    %783 = vmatprep.subr.mxu0 0.0
    %784 = vmatpush2.msra.mxu0 0.0
    %785 = vmatprep.subr.mxu0 0.0
    %786 = vmatpush2.msra.mxu0 0.0
    %787 = vmatprep.subr.mxu0 0.0
    %788 = vmatpush2.msra.mxu0 0.0
    %789 = vmatprep.subr.mxu0 0.0
    %790 = vmatpush2.msra.mxu0 0.0
    %791 = vmatprep.subr.mxu0 0.0
    %792 = vmatpush2.msra.mxu0 0.0
    %793 = vmatprep.subr.mxu0 0.0
    %794 = vmatpush2.msra.mxu0 0.0
    %795 = vmatprep.subr.mxu0 0.0
    %796 = vmatpush2.msra.mxu0 0.0
    %797 = vmatprep.mubr.f32.mxu0 0.0
    %798 = vmatmul.mubr.f32.gmra.mxu0 %v645
    %v799 = vpop.f32.mrf.mxu0
    %v800 = vadd.f32 %v716, %v799
    %v801 = vpop.f32.mrf.mxu0
    %v802 = vadd.f32 %v720, %v801
    %803 = vdwg.mxu0
    %804 = vmatprep.subr.mxu0 %v710
    %805 = vmatpush1.msra.mxu0 %v709
    %806 = vmatprep.subr.mxu0 %v706
    %807 = vmatpush1.msra.mxu0 %v705
    %808 = vmatprep.subr.mxu0 %v702
    %809 = vmatpush1.msra.mxu0 %v701
    %810 = vmatprep.subr.mxu0 %v698
    %811 = vmatpush1.msra.mxu0 %v697
    %812 = vmatprep.subr.mxu0 %v694
    %813 = vmatpush1.msra.mxu0 %v693
    %814 = vmatprep.subr.mxu0 %v690
    %815 = vmatpush1.msra.mxu0 %v689
    %816 = vmatprep.subr.mxu0 %v686
    %817 = vmatpush1.msra.mxu0 %v685
    %818 = vmatprep.subr.mxu0 %v682
    %819 = vmatpush1.msra.mxu0 %v681
    %820 = vmatprep.subr.mxu0 %v678
    %821 = vmatpush1.msra.mxu0 %v677
    %822 = vmatprep.subr.mxu0 %v674
    %823 = vmatpush1.msra.mxu0 %v673
    %824 = vmatprep.subr.mxu0 %v670
    %825 = vmatpush1.msra.mxu0 %v669
    %826 = vmatprep.subr.mxu0 %v666
    %827 = vmatpush1.msra.mxu0 %v665
    %828 = vmatprep.subr.mxu0 %v662
    %829 = vmatpush1.msra.mxu0 %v661
    %830 = vmatprep.subr.mxu0 %v658
    %831 = vmatpush1.msra.mxu0 %v657
    %832 = vmatprep.subr.mxu0 %v654
    %833 = vmatpush1.msra.mxu0 %v653
    %834 = vmatprep.subr.mxu0 %v650
    %835 = vmatpush1.msra.mxu0 %v649
    %836 = vmatprep.subr.mxu0 0.0
    %837 = vmatpush2.msra.mxu0 0.0
    %838 = vmatprep.subr.mxu0 0.0
    %839 = vmatpush2.msra.mxu0 0.0
    %840 = vmatprep.subr.mxu0 0.0
    %841 = vmatpush2.msra.mxu0 0.0
    %842 = vmatprep.subr.mxu0 0.0
    %843 = vmatpush2.msra.mxu0 0.0
    %844 = vmatprep.subr.mxu0 0.0
    %845 = vmatpush2.msra.mxu0 0.0
    %846 = vmatprep.subr.mxu0 0.0
    %847 = vmatpush2.msra.mxu0 0.0
    %848 = vmatprep.subr.mxu0 0.0
    %849 = vmatpush2.msra.mxu0 0.0
    %850 = vmatprep.subr.mxu0 0.0
    %851 = vmatpush2.msra.mxu0 0.0
    %852 = vmatprep.subr.mxu0 0.0
    %853 = vmatpush2.msra.mxu0 0.0
    %854 = vmatprep.subr.mxu0 0.0
    %855 = vmatpush2.msra.mxu0 0.0
    %856 = vmatprep.subr.mxu0 0.0
    %857 = vmatpush2.msra.mxu0 0.0
    %858 = vmatprep.subr.mxu0 0.0
    %859 = vmatpush2.msra.mxu0 0.0
    %860 = vmatprep.subr.mxu0 0.0
    %861 = vmatpush2.msra.mxu0 0.0
    %862 = vmatprep.subr.mxu0 0.0
    %863 = vmatpush2.msra.mxu0 0.0
    %864 = vmatprep.subr.mxu0 0.0
    %865 = vmatpush2.msra.mxu0 0.0
    %866 = vmatprep.subr.mxu0 0.0
    %867 = vmatpush2.msra.mxu0 0.0
    %868 = vmatprep.mubr.f32.mxu0 0.0
    %869 = vmatmul.mubr.f32.gmra.mxu0 %v645
    %v870 = vpop.f32.mrf.mxu0
    %v871 = vadd.f32 %v724, %v870
    %v872 = vpop.f32.mrf.mxu0
    %v873 = vadd.f32 %v728, %v872
    %874 = vdwg.mxu0
    %v875 = vxor.u32 %v800, 2147483648
    %v876 = vxor.u32 %v802, 2147483648
    %v877 = vxor.u32 %v871, 2147483648
    %v878 = vmul.f32 %v875, 1.442695
    %v879 = vpow.pop %v878
    %v880 = vmul.f32 %v876, 1.442695
    %v881 = vpow.pop %v880
    %v882 = vmul.f32 %v877, 1.442695
    %v883 = vpow.pop %v882
    %v884 = vadd.f32 %v879, 1.0
    %v885 = vadd.f32 %v881, 1.0
    %v886 = vadd.f32 %v883, 1.0
    %v887 = vrcp.pop %v884
    %v888 = vmul.f32 1.0, %v887
    %v889 = vrcp.pop %v885
    %v890 = vmul.f32 1.0, %v889
    %v891 = vrcp.pop %v886
    %v892 = vmul.f32 1.0, %v891
    %v893 = vtanh.pop %v873
    %v894 = vmul.f32 %v890, %v643
    %v895 = vmul.f32 %v888, %v893
    %v896 = vadd.f32 %v894, %v895
    %v897 = vtanh.pop %v896
    %v898 = vmul.f32 %v892, %v897
    %s899 = scalar_lea.vmem [#allocation2], 8
    %900 = vst [vmem:[%s899] sm:$0xff] %v898
    %901 = vmatprep.subr.mxu0 %v708
    %902 = vmatpush1.msra.mxu0 %v707
    %903 = vmatprep.subr.mxu0 %v704
    %904 = vmatpush1.msra.mxu0 %v703
    %905 = vmatprep.subr.mxu0 %v700
    %906 = vmatpush1.msra.mxu0 %v699
    %907 = vmatprep.subr.mxu0 %v696
    %908 = vmatpush1.msra.mxu0 %v695
    %909 = vmatprep.subr.mxu0 %v692
    %910 = vmatpush1.msra.mxu0 %v691
    %911 = vmatprep.subr.mxu0 %v688
    %912 = vmatpush1.msra.mxu0 %v687
    %913 = vmatprep.subr.mxu0 %v684
    %914 = vmatpush1.msra.mxu0 %v683
    %915 = vmatprep.subr.mxu0 %v680
    %916 = vmatpush1.msra.mxu0 %v679
    %917 = vmatprep.subr.mxu0 %v676
    %918 = vmatpush1.msra.mxu0 %v675
    %919 = vmatprep.subr.mxu0 %v672
    %920 = vmatpush1.msra.mxu0 %v671
    %921 = vmatprep.subr.mxu0 %v668
    %922 = vmatpush1.msra.mxu0 %v667
    %923 = vmatprep.subr.mxu0 %v664
    %924 = vmatpush1.msra.mxu0 %v663
    %925 = vmatprep.subr.mxu0 %v660
    %926 = vmatpush1.msra.mxu0 %v659
    %927 = vmatprep.subr.mxu0 %v656
    %928 = vmatpush1.msra.mxu0 %v655
    %929 = vmatprep.subr.mxu0 %v652
    %930 = vmatpush1.msra.mxu0 %v651
    %931 = vmatprep.subr.mxu0 %v648
    %932 = vmatpush1.msra.mxu0 %v647
    %933 = vmatprep.subr.mxu0 0.0
    %934 = vmatpush2.msra.mxu0 0.0
    %935 = vmatprep.subr.mxu0 0.0
    %936 = vmatpush2.msra.mxu0 0.0
    %937 = vmatprep.subr.mxu0 0.0
    %938 = vmatpush2.msra.mxu0 0.0
    %939 = vmatprep.subr.mxu0 0.0
    %940 = vmatpush2.msra.mxu0 0.0
    %941 = vmatprep.subr.mxu0 0.0
    %942 = vmatpush2.msra.mxu0 0.0
    %943 = vmatprep.subr.mxu0 0.0
    %944 = vmatpush2.msra.mxu0 0.0
    %945 = vmatprep.subr.mxu0 0.0
    %946 = vmatpush2.msra.mxu0 0.0
    %947 = vmatprep.subr.mxu0 0.0
    %948 = vmatpush2.msra.mxu0 0.0
    %949 = vmatprep.subr.mxu0 0.0
    %950 = vmatpush2.msra.mxu0 0.0
    %951 = vmatprep.subr.mxu0 0.0
    %952 = vmatpush2.msra.mxu0 0.0
    %953 = vmatprep.subr.mxu0 0.0
    %954 = vmatpush2.msra.mxu0 0.0
    %955 = vmatprep.subr.mxu0 0.0
    %956 = vmatpush2.msra.mxu0 0.0
    %957 = vmatprep.subr.mxu0 0.0
    %958 = vmatpush2.msra.mxu0 0.0
    %959 = vmatprep.subr.mxu0 0.0
    %960 = vmatpush2.msra.mxu0 0.0
    %961 = vmatprep.subr.mxu0 0.0
    %962 = vmatpush2.msra.mxu0 0.0
    %963 = vmatprep.subr.mxu0 0.0
    %964 = vmatpush2.msra.mxu0 0.0
    %965 = vmatprep.mubr.f32.mxu0 0.0
    %966 = vmatmul.mubr.f32.gmra.mxu0 %v898
    %v967 = vpop.f32.mrf.mxu0
    %v968 = vadd.f32 %v716, %v967
    %v969 = vpop.f32.mrf.mxu0
    %v970 = vadd.f32 %v720, %v969
    %971 = vdwg.mxu0
    %972 = vmatprep.subr.mxu0 %v710
    %973 = vmatpush1.msra.mxu0 %v709
    %974 = vmatprep.subr.mxu0 %v706
    %975 = vmatpush1.msra.mxu0 %v705
    %976 = vmatprep.subr.mxu0 %v702
    %977 = vmatpush1.msra.mxu0 %v701
    %978 = vmatprep.subr.mxu0 %v698
    %979 = vmatpush1.msra.mxu0 %v697
    %980 = vmatprep.subr.mxu0 %v694
    %981 = vmatpush1.msra.mxu0 %v693
    %982 = vmatprep.subr.mxu0 %v690
    %983 = vmatpush1.msra.mxu0 %v689
    %984 = vmatprep.subr.mxu0 %v686
    %985 = vmatpush1.msra.mxu0 %v685
    %986 = vmatprep.subr.mxu0 %v682
    %987 = vmatpush1.msra.mxu0 %v681
    %988 = vmatprep.subr.mxu0 %v678
    %989 = vmatpush1.msra.mxu0 %v677
    %990 = vmatprep.subr.mxu0 %v674
    %991 = vmatpush1.msra.mxu0 %v673
    %992 = vmatprep.subr.mxu0 %v670
    %993 = vmatpush1.msra.mxu0 %v669
    %994 = vmatprep.subr.mxu0 %v666
    %995 = vmatpush1.msra.mxu0 %v665
    %996 = vmatprep.subr.mxu0 %v662
    %997 = vmatpush1.msra.mxu0 %v661
    %998 = vmatprep.subr.mxu0 %v658
    %999 = vmatpush1.msra.mxu0 %v657
    %1000 = vmatprep.subr.mxu0 %v654
    %1001 = vmatpush1.msra.mxu0 %v653
    %1002 = vmatprep.subr.mxu0 %v650
    %1003 = vmatpush1.msra.mxu0 %v649
    %1004 = vmatprep.subr.mxu0 0.0
    %1005 = vmatpush2.msra.mxu0 0.0
    %1006 = vmatprep.subr.mxu0 0.0
    %1007 = vmatpush2.msra.mxu0 0.0
    %1008 = vmatprep.subr.mxu0 0.0
    %1009 = vmatpush2.msra.mxu0 0.0
    %1010 = vmatprep.subr.mxu0 0.0
    %1011 = vmatpush2.msra.mxu0 0.0
    %1012 = vmatprep.subr.mxu0 0.0
    %1013 = vmatpush2.msra.mxu0 0.0
    %1014 = vmatprep.subr.mxu0 0.0
    %1015 = vmatpush2.msra.mxu0 0.0
    %1016 = vmatprep.subr.mxu0 0.0
    %1017 = vmatpush2.msra.mxu0 0.0
    %1018 = vmatprep.subr.mxu0 0.0
    %1019 = vmatpush2.msra.mxu0 0.0
    %1020 = vmatprep.subr.mxu0 0.0
    %1021 = vmatpush2.msra.mxu0 0.0
    %1022 = vmatprep.subr.mxu0 0.0
    %1023 = vmatpush2.msra.mxu0 0.0
    %1024 = vmatprep.subr.mxu0 0.0
    %1025 = vmatpush2.msra.mxu0 0.0
    %1026 = vmatprep.subr.mxu0 0.0
    %1027 = vmatpush2.msra.mxu0 0.0
    %1028 = vmatprep.subr.mxu0 0.0
    %1029 = vmatpush2.msra.mxu0 0.0
    %1030 = vmatprep.subr.mxu0 0.0
    %1031 = vmatpush2.msra.mxu0 0.0
    %1032 = vmatprep.subr.mxu0 0.0
    %1033 = vmatpush2.msra.mxu0 0.0
    %1034 = vmatprep.subr.mxu0 0.0
    %1035 = vmatpush2.msra.mxu0 0.0
    %1036 = vmatprep.mubr.f32.mxu0 0.0
    %1037 = vmatmul.mubr.f32.gmra.mxu0 %v898
    %v1038 = vpop.f32.mrf.mxu0
    %v1039 = vadd.f32 %v724, %v1038
    %v1040 = vpop.f32.mrf.mxu0
    %v1041 = vadd.f32 %v728, %v1040
    %1042 = vdwg.mxu0
    %v1043 = vxor.u32 %v968, 2147483648
    %v1044 = vxor.u32 %v970, 2147483648
    %v1045 = vxor.u32 %v1039, 2147483648
    %v1046 = vmul.f32 %v1043, 1.442695
    %v1047 = vpow.pop %v1046
    %v1048 = vmul.f32 %v1044, 1.442695
    %v1049 = vpow.pop %v1048
    %v1050 = vmul.f32 %v1045, 1.442695
    %v1051 = vpow.pop %v1050
    %v1052 = vadd.f32 %v1047, 1.0
    %v1053 = vadd.f32 %v1049, 1.0
    %v1054 = vadd.f32 %v1051, 1.0
    %v1055 = vrcp.pop %v1052
    %v1056 = vmul.f32 1.0, %v1055
    %v1057 = vrcp.pop %v1053
    %v1058 = vmul.f32 1.0, %v1057
    %v1059 = vrcp.pop %v1054
    %v1060 = vmul.f32 1.0, %v1059
    %v1061 = vtanh.pop %v1041
    %v1062 = vmul.f32 %v1058, %v896
    %v1063 = vmul.f32 %v1056, %v1061
    %v1064 = vadd.f32 %v1062, %v1063
    %v1065 = vtanh.pop %v1064
    %v1066 = vmul.f32 %v1060, %v1065
    %s1067 = scalar_lea.vmem [#allocation2], 16
    %1068 = vst [vmem:[%s1067] sm:$0xff] %v1066
    %1069 = vmatprep.subr.mxu0 %v708
    %1070 = vmatpush1.msra.mxu0 %v707
    %1071 = vmatprep.subr.mxu0 %v704
    %1072 = vmatpush1.msra.mxu0 %v703
    %1073 = vmatprep.subr.mxu0 %v700
    %1074 = vmatpush1.msra.mxu0 %v699
    %1075 = vmatprep.subr.mxu0 %v696
    %1076 = vmatpush1.msra.mxu0 %v695
    %1077 = vmatprep.subr.mxu0 %v692
    %1078 = vmatpush1.msra.mxu0 %v691
    %1079 = vmatprep.subr.mxu0 %v688
    %1080 = vmatpush1.msra.mxu0 %v687
    %1081 = vmatprep.subr.mxu0 %v684
    %1082 = vmatpush1.msra.mxu0 %v683
    %1083 = vmatprep.subr.mxu0 %v680
    %1084 = vmatpush1.msra.mxu0 %v679
    %1085 = vmatprep.subr.mxu0 %v676
    %1086 = vmatpush1.msra.mxu0 %v675
    %1087 = vmatprep.subr.mxu0 %v672
    %1088 = vmatpush1.msra.mxu0 %v671
    %1089 = vmatprep.subr.mxu0 %v668
    %1090 = vmatpush1.msra.mxu0 %v667
    %1091 = vmatprep.subr.mxu0 %v664
    %1092 = vmatpush1.msra.mxu0 %v663
    %1093 = vmatprep.subr.mxu0 %v660
    %1094 = vmatpush1.msra.mxu0 %v659
    %1095 = vmatprep.subr.mxu0 %v656
    %1096 = vmatpush1.msra.mxu0 %v655
    %1097 = vmatprep.subr.mxu0 %v652
    %1098 = vmatpush1.msra.mxu0 %v651
    %1099 = vmatprep.subr.mxu0 %v648
    %1100 = vmatpush1.msra.mxu0 %v647
    %1101 = vmatprep.subr.mxu0 0.0
    %1102 = vmatpush2.msra.mxu0 0.0
    %1103 = vmatprep.subr.mxu0 0.0
    %1104 = vmatpush2.msra.mxu0 0.0
    %1105 = vmatprep.subr.mxu0 0.0
    %1106 = vmatpush2.msra.mxu0 0.0
    %1107 = vmatprep.subr.mxu0 0.0
    %1108 = vmatpush2.msra.mxu0 0.0
    %1109 = vmatprep.subr.mxu0 0.0
    %1110 = vmatpush2.msra.mxu0 0.0
    %1111 = vmatprep.subr.mxu0 0.0
    %1112 = vmatpush2.msra.mxu0 0.0
    %1113 = vmatprep.subr.mxu0 0.0
    %1114 = vmatpush2.msra.mxu0 0.0
    %1115 = vmatprep.subr.mxu0 0.0
    %1116 = vmatpush2.msra.mxu0 0.0
    %1117 = vmatprep.subr.mxu0 0.0
    %1118 = vmatpush2.msra.mxu0 0.0
    %1119 = vmatprep.subr.mxu0 0.0
    %1120 = vmatpush2.msra.mxu0 0.0
    %1121 = vmatprep.subr.mxu0 0.0
    %1122 = vmatpush2.msra.mxu0 0.0
    %1123 = vmatprep.subr.mxu0 0.0
    %1124 = vmatpush2.msra.mxu0 0.0
    %1125 = vmatprep.subr.mxu0 0.0
    %1126 = vmatpush2.msra.mxu0 0.0
    %1127 = vmatprep.subr.mxu0 0.0
    %1128 = vmatpush2.msra.mxu0 0.0
    %1129 = vmatprep.subr.mxu0 0.0
    %1130 = vmatpush2.msra.mxu0 0.0
    %1131 = vmatprep.subr.mxu0 0.0
    %1132 = vmatpush2.msra.mxu0 0.0
    %1133 = vmatprep.mubr.f32.mxu0 0.0
    %1134 = vmatmul.mubr.f32.gmra.mxu0 %v1066
    %v1135 = vpop.f32.mrf.mxu0
    %v1136 = vadd.f32 %v716, %v1135
    %v1137 = vpop.f32.mrf.mxu0
    %v1138 = vadd.f32 %v720, %v1137
    %1139 = vdwg.mxu0
    %1140 = vmatprep.subr.mxu0 %v710
    %1141 = vmatpush1.msra.mxu0 %v709
    %1142 = vmatprep.subr.mxu0 %v706
    %1143 = vmatpush1.msra.mxu0 %v705
    %1144 = vmatprep.subr.mxu0 %v702
    %1145 = vmatpush1.msra.mxu0 %v701
    %1146 = vmatprep.subr.mxu0 %v698
    %1147 = vmatpush1.msra.mxu0 %v697
    %1148 = vmatprep.subr.mxu0 %v694
    %1149 = vmatpush1.msra.mxu0 %v693
    %1150 = vmatprep.subr.mxu0 %v690
    %1151 = vmatpush1.msra.mxu0 %v689
    %1152 = vmatprep.subr.mxu0 %v686
    %1153 = vmatpush1.msra.mxu0 %v685
    %1154 = vmatprep.subr.mxu0 %v682
    %1155 = vmatpush1.msra.mxu0 %v681
    %1156 = vmatprep.subr.mxu0 %v678
    %1157 = vmatpush1.msra.mxu0 %v677
    %1158 = vmatprep.subr.mxu0 %v674
    %1159 = vmatpush1.msra.mxu0 %v673
    %1160 = vmatprep.subr.mxu0 %v670
    %1161 = vmatpush1.msra.mxu0 %v669
    %1162 = vmatprep.subr.mxu0 %v666
    %1163 = vmatpush1.msra.mxu0 %v665
    %1164 = vmatprep.subr.mxu0 %v662
    %1165 = vmatpush1.msra.mxu0 %v661
    %1166 = vmatprep.subr.mxu0 %v658
    %1167 = vmatpush1.msra.mxu0 %v657
    %1168 = vmatprep.subr.mxu0 %v654
    %1169 = vmatpush1.msra.mxu0 %v653
    %1170 = vmatprep.subr.mxu0 %v650
    %1171 = vmatpush1.msra.mxu0 %v649
    %1172 = vmatprep.subr.mxu0 0.0
    %1173 = vmatpush2.msra.mxu0 0.0
    %1174 = vmatprep.subr.mxu0 0.0
    %1175 = vmatpush2.msra.mxu0 0.0
    %1176 = vmatprep.subr.mxu0 0.0
    %1177 = vmatpush2.msra.mxu0 0.0
    %1178 = vmatprep.subr.mxu0 0.0
    %1179 = vmatpush2.msra.mxu0 0.0
    %1180 = vmatprep.subr.mxu0 0.0
    %1181 = vmatpush2.msra.mxu0 0.0
    %1182 = vmatprep.subr.mxu0 0.0
    %1183 = vmatpush2.msra.mxu0 0.0
    %1184 = vmatprep.subr.mxu0 0.0
    %1185 = vmatpush2.msra.mxu0 0.0
    %1186 = vmatprep.subr.mxu0 0.0
    %1187 = vmatpush2.msra.mxu0 0.0
    %1188 = vmatprep.subr.mxu0 0.0
    %1189 = vmatpush2.msra.mxu0 0.0
    %1190 = vmatprep.subr.mxu0 0.0
    %1191 = vmatpush2.msra.mxu0 0.0
    %1192 = vmatprep.subr.mxu0 0.0
    %1193 = vmatpush2.msra.mxu0 0.0
    %1194 = vmatprep.subr.mxu0 0.0
    %1195 = vmatpush2.msra.mxu0 0.0
    %1196 = vmatprep.subr.mxu0 0.0
    %1197 = vmatpush2.msra.mxu0 0.0
    %1198 = vmatprep.subr.mxu0 0.0
    %1199 = vmatpush2.msra.mxu0 0.0
    %1200 = vmatprep.subr.mxu0 0.0
    %1201 = vmatpush2.msra.mxu0 0.0
    %1202 = vmatprep.subr.mxu0 0.0
    %1203 = vmatpush2.msra.mxu0 0.0
    %1204 = vmatprep.mubr.f32.mxu0 0.0
    %1205 = vmatmul.mubr.f32.gmra.mxu0 %v1066
    %v1206 = vpop.f32.mrf.mxu0
    %v1207 = vadd.f32 %v724, %v1206
    %v1208 = vpop.f32.mrf.mxu0
    %v1209 = vadd.f32 %v728, %v1208
    %1210 = vdwg.mxu0
    %v1211 = vxor.u32 %v1136, 2147483648
    %v1212 = vxor.u32 %v1138, 2147483648
    %v1213 = vxor.u32 %v1207, 2147483648
    %v1214 = vmul.f32 %v1211, 1.442695
    %v1215 = vpow.pop %v1214
    %v1216 = vmul.f32 %v1212, 1.442695
    %v1217 = vpow.pop %v1216
    %v1218 = vmul.f32 %v1213, 1.442695
    %v1219 = vpow.pop %v1218
    %v1220 = vadd.f32 %v1215, 1.0
    %v1221 = vadd.f32 %v1217, 1.0
    %v1222 = vadd.f32 %v1219, 1.0
    %v1223 = vrcp.pop %v1220
    %v1224 = vmul.f32 1.0, %v1223
    %v1225 = vrcp.pop %v1221
    %v1226 = vmul.f32 1.0, %v1225
    %v1227 = vrcp.pop %v1222
    %v1228 = vmul.f32 1.0, %v1227
    %v1229 = vtanh.pop %v1209
    %v1230 = vmul.f32 %v1226, %v1064
    %v1231 = vmul.f32 %v1224, %v1229
    %v1232 = vadd.f32 %v1230, %v1231
    %v1233 = vtanh.pop %v1232
    %v1234 = vmul.f32 %v1228, %v1233
    %s1235 = scalar_lea.vmem [#allocation2], 24
    %1236 = vst [vmem:[%s1235] sm:$0xff] %v1234
    %1237 = vmatprep.subr.mxu0 %v708
    %1238 = vmatpush1.msra.mxu0 %v707
    %1239 = vmatprep.subr.mxu0 %v704
    %1240 = vmatpush1.msra.mxu0 %v703
    %1241 = vmatprep.subr.mxu0 %v700
    %1242 = vmatpush1.msra.mxu0 %v699
    %1243 = vmatprep.subr.mxu0 %v696
    %1244 = vmatpush1.msra.mxu0 %v695
    %1245 = vmatprep.subr.mxu0 %v692
    %1246 = vmatpush1.msra.mxu0 %v691
    %1247 = vmatprep.subr.mxu0 %v688
    %1248 = vmatpush1.msra.mxu0 %v687
    %1249 = vmatprep.subr.mxu0 %v684
    %1250 = vmatpush1.msra.mxu0 %v683
    %1251 = vmatprep.subr.mxu0 %v680
    %1252 = vmatpush1.msra.mxu0 %v679
    %1253 = vmatprep.subr.mxu0 %v676
    %1254 = vmatpush1.msra.mxu0 %v675
    %1255 = vmatprep.subr.mxu0 %v672
    %1256 = vmatpush1.msra.mxu0 %v671
    %1257 = vmatprep.subr.mxu0 %v668
    %1258 = vmatpush1.msra.mxu0 %v667
    %1259 = vmatprep.subr.mxu0 %v664
    %1260 = vmatpush1.msra.mxu0 %v663
    %1261 = vmatprep.subr.mxu0 %v660
    %1262 = vmatpush1.msra.mxu0 %v659
    %1263 = vmatprep.subr.mxu0 %v656
    %1264 = vmatpush1.msra.mxu0 %v655
    %1265 = vmatprep.subr.mxu0 %v652
    %1266 = vmatpush1.msra.mxu0 %v651
    %1267 = vmatprep.subr.mxu0 %v648
    %1268 = vmatpush1.msra.mxu0 %v647
    %1269 = vmatprep.subr.mxu0 0.0
    %1270 = vmatpush2.msra.mxu0 0.0
    %1271 = vmatprep.subr.mxu0 0.0
    %1272 = vmatpush2.msra.mxu0 0.0
    %1273 = vmatprep.subr.mxu0 0.0
    %1274 = vmatpush2.msra.mxu0 0.0
    %1275 = vmatprep.subr.mxu0 0.0
    %1276 = vmatpush2.msra.mxu0 0.0
    %1277 = vmatprep.subr.mxu0 0.0
    %1278 = vmatpush2.msra.mxu0 0.0
    %1279 = vmatprep.subr.mxu0 0.0
    %1280 = vmatpush2.msra.mxu0 0.0
    %1281 = vmatprep.subr.mxu0 0.0
    %1282 = vmatpush2.msra.mxu0 0.0
    %1283 = vmatprep.subr.mxu0 0.0
    %1284 = vmatpush2.msra.mxu0 0.0
    %1285 = vmatprep.subr.mxu0 0.0
    %1286 = vmatpush2.msra.mxu0 0.0
    %1287 = vmatprep.subr.mxu0 0.0
    %1288 = vmatpush2.msra.mxu0 0.0
    %1289 = vmatprep.subr.mxu0 0.0
    %1290 = vmatpush2.msra.mxu0 0.0
    %1291 = vmatprep.subr.mxu0 0.0
    %1292 = vmatpush2.msra.mxu0 0.0
    %1293 = vmatprep.subr.mxu0 0.0
    %1294 = vmatpush2.msra.mxu0 0.0
    %1295 = vmatprep.subr.mxu0 0.0
    %1296 = vmatpush2.msra.mxu0 0.0
    %1297 = vmatprep.subr.mxu0 0.0
    %1298 = vmatpush2.msra.mxu0 0.0
    %1299 = vmatprep.subr.mxu0 0.0
    %1300 = vmatpush2.msra.mxu0 0.0
    %1301 = vmatprep.mubr.f32.mxu0 0.0
    %1302 = vmatmul.mubr.f32.gmra.mxu0 %v1234
    %v1303 = vpop.f32.mrf.mxu0
    %v1304 = vadd.f32 %v716, %v1303
    %v1305 = vpop.f32.mrf.mxu0
    %v1306 = vadd.f32 %v720, %v1305
    %1307 = vdwg.mxu0
    %1308 = vmatprep.subr.mxu0 %v710
    %1309 = vmatpush1.msra.mxu0 %v709
    %1310 = vmatprep.subr.mxu0 %v706
    %1311 = vmatpush1.msra.mxu0 %v705
    %1312 = vmatprep.subr.mxu0 %v702
    %1313 = vmatpush1.msra.mxu0 %v701
    %1314 = vmatprep.subr.mxu0 %v698
    %1315 = vmatpush1.msra.mxu0 %v697
    %1316 = vmatprep.subr.mxu0 %v694
    %1317 = vmatpush1.msra.mxu0 %v693
    %1318 = vmatprep.subr.mxu0 %v690
    %1319 = vmatpush1.msra.mxu0 %v689
    %1320 = vmatprep.subr.mxu0 %v686
    %1321 = vmatpush1.msra.mxu0 %v685
    %1322 = vmatprep.subr.mxu0 %v682
    %1323 = vmatpush1.msra.mxu0 %v681
    %1324 = vmatprep.subr.mxu0 %v678
    %1325 = vmatpush1.msra.mxu0 %v677
    %1326 = vmatprep.subr.mxu0 %v674
    %1327 = vmatpush1.msra.mxu0 %v673
    %1328 = vmatprep.subr.mxu0 %v670
    %1329 = vmatpush1.msra.mxu0 %v669
    %1330 = vmatprep.subr.mxu0 %v666
    %1331 = vmatpush1.msra.mxu0 %v665
    %1332 = vmatprep.subr.mxu0 %v662
    %1333 = vmatpush1.msra.mxu0 %v661
    %1334 = vmatprep.subr.mxu0 %v658
    %1335 = vmatpush1.msra.mxu0 %v657
    %1336 = vmatprep.subr.mxu0 %v654
    %1337 = vmatpush1.msra.mxu0 %v653
    %1338 = vmatprep.subr.mxu0 %v650
    %1339 = vmatpush1.msra.mxu0 %v649
    %1340 = vmatprep.subr.mxu0 0.0
    %1341 = vmatpush2.msra.mxu0 0.0
    %1342 = vmatprep.subr.mxu0 0.0
    %1343 = vmatpush2.msra.mxu0 0.0
    %1344 = vmatprep.subr.mxu0 0.0
    %1345 = vmatpush2.msra.mxu0 0.0
    %1346 = vmatprep.subr.mxu0 0.0
    %1347 = vmatpush2.msra.mxu0 0.0
    %1348 = vmatprep.subr.mxu0 0.0
    %1349 = vmatpush2.msra.mxu0 0.0
    %1350 = vmatprep.subr.mxu0 0.0
    %1351 = vmatpush2.msra.mxu0 0.0
    %1352 = vmatprep.subr.mxu0 0.0
    %1353 = vmatpush2.msra.mxu0 0.0
    %1354 = vmatprep.subr.mxu0 0.0
    %1355 = vmatpush2.msra.mxu0 0.0
    %1356 = vmatprep.subr.mxu0 0.0
    %1357 = vmatpush2.msra.mxu0 0.0
    %1358 = vmatprep.subr.mxu0 0.0
    %1359 = vmatpush2.msra.mxu0 0.0
    %1360 = vmatprep.subr.mxu0 0.0
    %1361 = vmatpush2.msra.mxu0 0.0
    %1362 = vmatprep.subr.mxu0 0.0
    %1363 = vmatpush2.msra.mxu0 0.0
    %1364 = vmatprep.subr.mxu0 0.0
    %1365 = vmatpush2.msra.mxu0 0.0
    %1366 = vmatprep.subr.mxu0 0.0
    %1367 = vmatpush2.msra.mxu0 0.0
    %1368 = vmatprep.subr.mxu0 0.0
    %1369 = vmatpush2.msra.mxu0 0.0
    %1370 = vmatprep.subr.mxu0 0.0
    %1371 = vmatpush2.msra.mxu0 0.0
    %1372 = vmatprep.mubr.f32.mxu0 0.0
    %1373 = vmatmul.mubr.f32.gmra.mxu0 %v1234
    %v1374 = vpop.f32.mrf.mxu0
    %v1375 = vadd.f32 %v724, %v1374
    %v1376 = vpop.f32.mrf.mxu0
    %v1377 = vadd.f32 %v728, %v1376
    %1378 = vdwg.mxu0
    %v1379 = vxor.u32 %v1304, 2147483648
    %v1380 = vxor.u32 %v1306, 2147483648
    %v1381 = vxor.u32 %v1375, 2147483648
    %v1382 = vmul.f32 %v1379, 1.442695
    %v1383 = vpow.pop %v1382
    %v1384 = vmul.f32 %v1380, 1.442695
    %v1385 = vpow.pop %v1384
    %v1386 = vmul.f32 %v1381, 1.442695
    %v1387 = vpow.pop %v1386
    %v1388 = vadd.f32 %v1383, 1.0
    %v1389 = vadd.f32 %v1385, 1.0
    %v1390 = vadd.f32 %v1387, 1.0
    %v1391 = vrcp.pop %v1388
    %v1392 = vmul.f32 1.0, %v1391
    %v1393 = vrcp.pop %v1389
    %v1394 = vmul.f32 1.0, %v1393
    %v1395 = vrcp.pop %v1390
    %v1396 = vmul.f32 1.0, %v1395
    %v1397 = vtanh.pop %v1377
    %v1398 = vmul.f32 %v1394, %v1232
    %v1399 = vmul.f32 %v1392, %v1397
    %v1400 = vadd.f32 %v1398, %v1399
    %v1401 = vtanh.pop %v1400
    %v1402 = vmul.f32 %v1396, %v1401
    %s1403 = scalar_lea.vmem [#allocation2], 32
    %1404 = vst [vmem:[%s1403] sm:$0xff] %v1402
    %1405 = vmatprep.subr.mxu0 %v708
    %1406 = vmatpush1.msra.mxu0 %v707
    %1407 = vmatprep.subr.mxu0 %v704
    %1408 = vmatpush1.msra.mxu0 %v703
    %1409 = vmatprep.subr.mxu0 %v700
    %1410 = vmatpush1.msra.mxu0 %v699
    %1411 = vmatprep.subr.mxu0 %v696
    %1412 = vmatpush1.msra.mxu0 %v695
    %1413 = vmatprep.subr.mxu0 %v692
    %1414 = vmatpush1.msra.mxu0 %v691
    %1415 = vmatprep.subr.mxu0 %v688
    %1416 = vmatpush1.msra.mxu0 %v687
    %1417 = vmatprep.subr.mxu0 %v684
    %1418 = vmatpush1.msra.mxu0 %v683
    %1419 = vmatprep.subr.mxu0 %v680
    %1420 = vmatpush1.msra.mxu0 %v679
    %1421 = vmatprep.subr.mxu0 %v676
    %1422 = vmatpush1.msra.mxu0 %v675
    %1423 = vmatprep.subr.mxu0 %v672
    %1424 = vmatpush1.msra.mxu0 %v671
    %1425 = vmatprep.subr.mxu0 %v668
    %1426 = vmatpush1.msra.mxu0 %v667
    %1427 = vmatprep.subr.mxu0 %v664
    %1428 = vmatpush1.msra.mxu0 %v663
    %1429 = vmatprep.subr.mxu0 %v660
    %1430 = vmatpush1.msra.mxu0 %v659
    %1431 = vmatprep.subr.mxu0 %v656
    %1432 = vmatpush1.msra.mxu0 %v655
    %1433 = vmatprep.subr.mxu0 %v652
    %1434 = vmatpush1.msra.mxu0 %v651
    %1435 = vmatprep.subr.mxu0 %v648
    %1436 = vmatpush1.msra.mxu0 %v647
    %1437 = vmatprep.subr.mxu0 0.0
    %1438 = vmatpush2.msra.mxu0 0.0
    %1439 = vmatprep.subr.mxu0 0.0
    %1440 = vmatpush2.msra.mxu0 0.0
    %1441 = vmatprep.subr.mxu0 0.0
    %1442 = vmatpush2.msra.mxu0 0.0
    %1443 = vmatprep.subr.mxu0 0.0
    %1444 = vmatpush2.msra.mxu0 0.0
    %1445 = vmatprep.subr.mxu0 0.0
    %1446 = vmatpush2.msra.mxu0 0.0
    %1447 = vmatprep.subr.mxu0 0.0
    %1448 = vmatpush2.msra.mxu0 0.0
    %1449 = vmatprep.subr.mxu0 0.0
    %1450 = vmatpush2.msra.mxu0 0.0
    %1451 = vmatprep.subr.mxu0 0.0
    %1452 = vmatpush2.msra.mxu0 0.0
    %1453 = vmatprep.subr.mxu0 0.0
    %1454 = vmatpush2.msra.mxu0 0.0
    %1455 = vmatprep.subr.mxu0 0.0
    %1456 = vmatpush2.msra.mxu0 0.0
    %1457 = vmatprep.subr.mxu0 0.0
    %1458 = vmatpush2.msra.mxu0 0.0
    %1459 = vmatprep.subr.mxu0 0.0
    %1460 = vmatpush2.msra.mxu0 0.0
    %1461 = vmatprep.subr.mxu0 0.0
    %1462 = vmatpush2.msra.mxu0 0.0
    %1463 = vmatprep.subr.mxu0 0.0
    %1464 = vmatpush2.msra.mxu0 0.0
    %1465 = vmatprep.subr.mxu0 0.0
    %1466 = vmatpush2.msra.mxu0 0.0
    %1467 = vmatprep.subr.mxu0 0.0
    %1468 = vmatpush2.msra.mxu0 0.0
    %1469 = vmatprep.mubr.f32.mxu0 0.0
    %1470 = vmatmul.mubr.f32.gmra.mxu0 %v1402
    %v1471 = vpop.f32.mrf.mxu0
    %v1472 = vadd.f32 %v716, %v1471
    %v1473 = vpop.f32.mrf.mxu0
    %v1474 = vadd.f32 %v720, %v1473
    %1475 = vdwg.mxu0
    %1476 = vmatprep.subr.mxu0 %v710
    %1477 = vmatpush1.msra.mxu0 %v709
    %1478 = vmatprep.subr.mxu0 %v706
    %1479 = vmatpush1.msra.mxu0 %v705
    %1480 = vmatprep.subr.mxu0 %v702
    %1481 = vmatpush1.msra.mxu0 %v701
    %1482 = vmatprep.subr.mxu0 %v698
    %1483 = vmatpush1.msra.mxu0 %v697
    %1484 = vmatprep.subr.mxu0 %v694
    %1485 = vmatpush1.msra.mxu0 %v693
    %1486 = vmatprep.subr.mxu0 %v690
    %1487 = vmatpush1.msra.mxu0 %v689
    %1488 = vmatprep.subr.mxu0 %v686
    %1489 = vmatpush1.msra.mxu0 %v685
    %1490 = vmatprep.subr.mxu0 %v682
    %1491 = vmatpush1.msra.mxu0 %v681
    %1492 = vmatprep.subr.mxu0 %v678
    %1493 = vmatpush1.msra.mxu0 %v677
    %1494 = vmatprep.subr.mxu0 %v674
    %1495 = vmatpush1.msra.mxu0 %v673
    %1496 = vmatprep.subr.mxu0 %v670
    %1497 = vmatpush1.msra.mxu0 %v669
    %1498 = vmatprep.subr.mxu0 %v666
    %1499 = vmatpush1.msra.mxu0 %v665
    %1500 = vmatprep.subr.mxu0 %v662
    %1501 = vmatpush1.msra.mxu0 %v661
    %1502 = vmatprep.subr.mxu0 %v658
    %1503 = vmatpush1.msra.mxu0 %v657
    %1504 = vmatprep.subr.mxu0 %v654
    %1505 = vmatpush1.msra.mxu0 %v653
    %1506 = vmatprep.subr.mxu0 %v650
    %1507 = vmatpush1.msra.mxu0 %v649
    %1508 = vmatprep.subr.mxu0 0.0
    %1509 = vmatpush2.msra.mxu0 0.0
    %1510 = vmatprep.subr.mxu0 0.0
    %1511 = vmatpush2.msra.mxu0 0.0
    %1512 = vmatprep.subr.mxu0 0.0
    %1513 = vmatpush2.msra.mxu0 0.0
    %1514 = vmatprep.subr.mxu0 0.0
    %1515 = vmatpush2.msra.mxu0 0.0
    %1516 = vmatprep.subr.mxu0 0.0
    %1517 = vmatpush2.msra.mxu0 0.0
    %1518 = vmatprep.subr.mxu0 0.0
    %1519 = vmatpush2.msra.mxu0 0.0
    %1520 = vmatprep.subr.mxu0 0.0
    %1521 = vmatpush2.msra.mxu0 0.0
    %1522 = vmatprep.subr.mxu0 0.0
    %1523 = vmatpush2.msra.mxu0 0.0
    %1524 = vmatprep.subr.mxu0 0.0
    %1525 = vmatpush2.msra.mxu0 0.0
    %1526 = vmatprep.subr.mxu0 0.0
    %1527 = vmatpush2.msra.mxu0 0.0
    %1528 = vmatprep.subr.mxu0 0.0
    %1529 = vmatpush2.msra.mxu0 0.0
    %1530 = vmatprep.subr.mxu0 0.0
    %1531 = vmatpush2.msra.mxu0 0.0
    %1532 = vmatprep.subr.mxu0 0.0
    %1533 = vmatpush2.msra.mxu0 0.0
    %1534 = vmatprep.subr.mxu0 0.0
    %1535 = vmatpush2.msra.mxu0 0.0
    %1536 = vmatprep.subr.mxu0 0.0
    %1537 = vmatpush2.msra.mxu0 0.0
    %1538 = vmatprep.subr.mxu0 0.0
    %1539 = vmatpush2.msra.mxu0 0.0
    %1540 = vmatprep.mubr.f32.mxu0 0.0
    %1541 = vmatmul.mubr.f32.gmra.mxu0 %v1402
    %v1542 = vpop.f32.mrf.mxu0
    %v1543 = vadd.f32 %v724, %v1542
    %v1544 = vpop.f32.mrf.mxu0
    %v1545 = vadd.f32 %v728, %v1544
    %1546 = vdwg.mxu0
    %v1547 = vxor.u32 %v1472, 2147483648
    %v1548 = vxor.u32 %v1474, 2147483648
    %v1549 = vxor.u32 %v1543, 2147483648
    %v1550 = vmul.f32 %v1547, 1.442695
    %v1551 = vpow.pop %v1550
    %v1552 = vmul.f32 %v1548, 1.442695
    %v1553 = vpow.pop %v1552
    %v1554 = vmul.f32 %v1549, 1.442695
    %v1555 = vpow.pop %v1554
    %v1556 = vadd.f32 %v1551, 1.0
    %v1557 = vadd.f32 %v1553, 1.0
    %v1558 = vadd.f32 %v1555, 1.0
    %v1559 = vrcp.pop %v1556
    %v1560 = vmul.f32 1.0, %v1559
    %v1561 = vrcp.pop %v1557
    %v1562 = vmul.f32 1.0, %v1561
    %v1563 = vrcp.pop %v1558
    %v1564 = vmul.f32 1.0, %v1563
    %v1565 = vtanh.pop %v1545
    %v1566 = vmul.f32 %v1562, %v1400
    %v1567 = vmul.f32 %v1560, %v1565
    %v1568 = vadd.f32 %v1566, %v1567
    %v1569 = vtanh.pop %v1568
    %v1570 = vmul.f32 %v1564, %v1569
    %s1571 = scalar_lea.vmem [#allocation2], 40
    %1572 = vst [vmem:[%s1571] sm:$0xff] %v1570
    %1573 = vmatprep.subr.mxu0 %v708
    %1574 = vmatpush1.msra.mxu0 %v707
    %1575 = vmatprep.subr.mxu0 %v704
    %1576 = vmatpush1.msra.mxu0 %v703
    %1577 = vmatprep.subr.mxu0 %v700
    %1578 = vmatpush1.msra.mxu0 %v699
    %1579 = vmatprep.subr.mxu0 %v696
    %1580 = vmatpush1.msra.mxu0 %v695
    %1581 = vmatprep.subr.mxu0 %v692
    %1582 = vmatpush1.msra.mxu0 %v691
    %1583 = vmatprep.subr.mxu0 %v688
    %1584 = vmatpush1.msra.mxu0 %v687
    %1585 = vmatprep.subr.mxu0 %v684
    %1586 = vmatpush1.msra.mxu0 %v683
    %1587 = vmatprep.subr.mxu0 %v680
    %1588 = vmatpush1.msra.mxu0 %v679
    %1589 = vmatprep.subr.mxu0 %v676
    %1590 = vmatpush1.msra.mxu0 %v675
    %1591 = vmatprep.subr.mxu0 %v672
    %1592 = vmatpush1.msra.mxu0 %v671
    %1593 = vmatprep.subr.mxu0 %v668
    %1594 = vmatpush1.msra.mxu0 %v667
    %1595 = vmatprep.subr.mxu0 %v664
    %1596 = vmatpush1.msra.mxu0 %v663
    %1597 = vmatprep.subr.mxu0 %v660
    %1598 = vmatpush1.msra.mxu0 %v659
    %1599 = vmatprep.subr.mxu0 %v656
    %1600 = vmatpush1.msra.mxu0 %v655
    %1601 = vmatprep.subr.mxu0 %v652
    %1602 = vmatpush1.msra.mxu0 %v651
    %1603 = vmatprep.subr.mxu0 %v648
    %1604 = vmatpush1.msra.mxu0 %v647
    %1605 = vmatprep.subr.mxu0 0.0
    %1606 = vmatpush2.msra.mxu0 0.0
    %1607 = vmatprep.subr.mxu0 0.0
    %1608 = vmatpush2.msra.mxu0 0.0
    %1609 = vmatprep.subr.mxu0 0.0
    %1610 = vmatpush2.msra.mxu0 0.0
    %1611 = vmatprep.subr.mxu0 0.0
    %1612 = vmatpush2.msra.mxu0 0.0
    %1613 = vmatprep.subr.mxu0 0.0
    %1614 = vmatpush2.msra.mxu0 0.0
    %1615 = vmatprep.subr.mxu0 0.0
    %1616 = vmatpush2.msra.mxu0 0.0
    %1617 = vmatprep.subr.mxu0 0.0
    %1618 = vmatpush2.msra.mxu0 0.0
    %1619 = vmatprep.subr.mxu0 0.0
    %1620 = vmatpush2.msra.mxu0 0.0
    %1621 = vmatprep.subr.mxu0 0.0
    %1622 = vmatpush2.msra.mxu0 0.0
    %1623 = vmatprep.subr.mxu0 0.0
    %1624 = vmatpush2.msra.mxu0 0.0
    %1625 = vmatprep.subr.mxu0 0.0
    %1626 = vmatpush2.msra.mxu0 0.0
    %1627 = vmatprep.subr.mxu0 0.0
    %1628 = vmatpush2.msra.mxu0 0.0
    %1629 = vmatprep.subr.mxu0 0.0
    %1630 = vmatpush2.msra.mxu0 0.0
    %1631 = vmatprep.subr.mxu0 0.0
    %1632 = vmatpush2.msra.mxu0 0.0
    %1633 = vmatprep.subr.mxu0 0.0
    %1634 = vmatpush2.msra.mxu0 0.0
    %1635 = vmatprep.subr.mxu0 0.0
    %1636 = vmatpush2.msra.mxu0 0.0
    %1637 = vmatprep.mubr.f32.mxu0 0.0
    %1638 = vmatmul.mubr.f32.gmra.mxu0 %v1570
    %v1639 = vpop.f32.mrf.mxu0
    %v1640 = vadd.f32 %v716, %v1639
    %v1641 = vpop.f32.mrf.mxu0
    %v1642 = vadd.f32 %v720, %v1641
    %1643 = vdwg.mxu0
    %1644 = vmatprep.subr.mxu0 %v710
    %1645 = vmatpush1.msra.mxu0 %v709
    %1646 = vmatprep.subr.mxu0 %v706
    %1647 = vmatpush1.msra.mxu0 %v705
    %1648 = vmatprep.subr.mxu0 %v702
    %1649 = vmatpush1.msra.mxu0 %v701
    %1650 = vmatprep.subr.mxu0 %v698
    %1651 = vmatpush1.msra.mxu0 %v697
    %1652 = vmatprep.subr.mxu0 %v694
    %1653 = vmatpush1.msra.mxu0 %v693
    %1654 = vmatprep.subr.mxu0 %v690
    %1655 = vmatpush1.msra.mxu0 %v689
    %1656 = vmatprep.subr.mxu0 %v686
    %1657 = vmatpush1.msra.mxu0 %v685
    %1658 = vmatprep.subr.mxu0 %v682
    %1659 = vmatpush1.msra.mxu0 %v681
    %1660 = vmatprep.subr.mxu0 %v678
    %1661 = vmatpush1.msra.mxu0 %v677
    %1662 = vmatprep.subr.mxu0 %v674
    %1663 = vmatpush1.msra.mxu0 %v673
    %1664 = vmatprep.subr.mxu0 %v670
    %1665 = vmatpush1.msra.mxu0 %v669
    %1666 = vmatprep.subr.mxu0 %v666
    %1667 = vmatpush1.msra.mxu0 %v665
    %1668 = vmatprep.subr.mxu0 %v662
    %1669 = vmatpush1.msra.mxu0 %v661
    %1670 = vmatprep.subr.mxu0 %v658
    %1671 = vmatpush1.msra.mxu0 %v657
    %1672 = vmatprep.subr.mxu0 %v654
    %1673 = vmatpush1.msra.mxu0 %v653
    %1674 = vmatprep.subr.mxu0 %v650
    %1675 = vmatpush1.msra.mxu0 %v649
    %1676 = vmatprep.subr.mxu0 0.0
    %1677 = vmatpush2.msra.mxu0 0.0
    %1678 = vmatprep.subr.mxu0 0.0
    %1679 = vmatpush2.msra.mxu0 0.0
    %1680 = vmatprep.subr.mxu0 0.0
    %1681 = vmatpush2.msra.mxu0 0.0
    %1682 = vmatprep.subr.mxu0 0.0
    %1683 = vmatpush2.msra.mxu0 0.0
    %1684 = vmatprep.subr.mxu0 0.0
    %1685 = vmatpush2.msra.mxu0 0.0
    %1686 = vmatprep.subr.mxu0 0.0
    %1687 = vmatpush2.msra.mxu0 0.0
    %1688 = vmatprep.subr.mxu0 0.0
    %1689 = vmatpush2.msra.mxu0 0.0
    %1690 = vmatprep.subr.mxu0 0.0
    %1691 = vmatpush2.msra.mxu0 0.0
    %1692 = vmatprep.subr.mxu0 0.0
    %1693 = vmatpush2.msra.mxu0 0.0
    %1694 = vmatprep.subr.mxu0 0.0
    %1695 = vmatpush2.msra.mxu0 0.0
    %1696 = vmatprep.subr.mxu0 0.0
    %1697 = vmatpush2.msra.mxu0 0.0
    %1698 = vmatprep.subr.mxu0 0.0
    %1699 = vmatpush2.msra.mxu0 0.0
    %1700 = vmatprep.subr.mxu0 0.0
    %1701 = vmatpush2.msra.mxu0 0.0
    %1702 = vmatprep.subr.mxu0 0.0
    %1703 = vmatpush2.msra.mxu0 0.0
    %1704 = vmatprep.subr.mxu0 0.0
    %1705 = vmatpush2.msra.mxu0 0.0
    %1706 = vmatprep.subr.mxu0 0.0
    %1707 = vmatpush2.msra.mxu0 0.0
    %1708 = vmatprep.mubr.f32.mxu0 0.0
    %1709 = vmatmul.mubr.f32.gmra.mxu0 %v1570
    %v1710 = vpop.f32.mrf.mxu0
    %v1711 = vadd.f32 %v724, %v1710
    %v1712 = vpop.f32.mrf.mxu0
    %v1713 = vadd.f32 %v728, %v1712
    %1714 = vdwg.mxu0
    %v1715 = vxor.u32 %v1640, 2147483648
    %v1716 = vxor.u32 %v1642, 2147483648
    %v1717 = vxor.u32 %v1711, 2147483648
    %v1718 = vmul.f32 %v1715, 1.442695
    %v1719 = vpow.pop %v1718
    %v1720 = vmul.f32 %v1716, 1.442695
    %v1721 = vpow.pop %v1720
    %v1722 = vmul.f32 %v1717, 1.442695
    %v1723 = vpow.pop %v1722
    %v1724 = vadd.f32 %v1719, 1.0
    %v1725 = vadd.f32 %v1721, 1.0
    %v1726 = vadd.f32 %v1723, 1.0
    %v1727 = vrcp.pop %v1724
    %v1728 = vmul.f32 1.0, %v1727
    %v1729 = vrcp.pop %v1725
    %v1730 = vmul.f32 1.0, %v1729
    %v1731 = vrcp.pop %v1726
    %v1732 = vmul.f32 1.0, %v1731
    %v1733 = vtanh.pop %v1713
    %v1734 = vmul.f32 %v1730, %v1568
    %v1735 = vmul.f32 %v1728, %v1733
    %v1736 = vadd.f32 %v1734, %v1735
    %v1737 = vtanh.pop %v1736
    %v1738 = vmul.f32 %v1732, %v1737
    %s1739 = scalar_lea.vmem [#allocation2], 48
    %1740 = vst [vmem:[%s1739] sm:$0xff] %v1738
    %1741 = vmatprep.subr.mxu0 %v708
    %1742 = vmatpush1.msra.mxu0 %v707
    %1743 = vmatprep.subr.mxu0 %v704
    %1744 = vmatpush1.msra.mxu0 %v703
    %1745 = vmatprep.subr.mxu0 %v700
    %1746 = vmatpush1.msra.mxu0 %v699
    %1747 = vmatprep.subr.mxu0 %v696
    %1748 = vmatpush1.msra.mxu0 %v695
    %1749 = vmatprep.subr.mxu0 %v692
    %1750 = vmatpush1.msra.mxu0 %v691
    %1751 = vmatprep.subr.mxu0 %v688
    %1752 = vmatpush1.msra.mxu0 %v687
    %1753 = vmatprep.subr.mxu0 %v684
    %1754 = vmatpush1.msra.mxu0 %v683
    %1755 = vmatprep.subr.mxu0 %v680
    %1756 = vmatpush1.msra.mxu0 %v679
    %1757 = vmatprep.subr.mxu0 %v676
    %1758 = vmatpush1.msra.mxu0 %v675
    %1759 = vmatprep.subr.mxu0 %v672
    %1760 = vmatpush1.msra.mxu0 %v671
    %1761 = vmatprep.subr.mxu0 %v668
    %1762 = vmatpush1.msra.mxu0 %v667
    %1763 = vmatprep.subr.mxu0 %v664
    %1764 = vmatpush1.msra.mxu0 %v663
    %1765 = vmatprep.subr.mxu0 %v660
    %1766 = vmatpush1.msra.mxu0 %v659
    %1767 = vmatprep.subr.mxu0 %v656
    %1768 = vmatpush1.msra.mxu0 %v655
    %1769 = vmatprep.subr.mxu0 %v652
    %1770 = vmatpush1.msra.mxu0 %v651
    %1771 = vmatprep.subr.mxu0 %v648
    %1772 = vmatpush1.msra.mxu0 %v647
    %1773 = vmatprep.subr.mxu0 0.0
    %1774 = vmatpush2.msra.mxu0 0.0
    %1775 = vmatprep.subr.mxu0 0.0
    %1776 = vmatpush2.msra.mxu0 0.0
    %1777 = vmatprep.subr.mxu0 0.0
    %1778 = vmatpush2.msra.mxu0 0.0
    %1779 = vmatprep.subr.mxu0 0.0
    %1780 = vmatpush2.msra.mxu0 0.0
    %1781 = vmatprep.subr.mxu0 0.0
    %1782 = vmatpush2.msra.mxu0 0.0
    %1783 = vmatprep.subr.mxu0 0.0
    %1784 = vmatpush2.msra.mxu0 0.0
    %1785 = vmatprep.subr.mxu0 0.0
    %1786 = vmatpush2.msra.mxu0 0.0
    %1787 = vmatprep.subr.mxu0 0.0
    %1788 = vmatpush2.msra.mxu0 0.0
    %1789 = vmatprep.subr.mxu0 0.0
    %1790 = vmatpush2.msra.mxu0 0.0
    %1791 = vmatprep.subr.mxu0 0.0
    %1792 = vmatpush2.msra.mxu0 0.0
    %1793 = vmatprep.subr.mxu0 0.0
    %1794 = vmatpush2.msra.mxu0 0.0
    %1795 = vmatprep.subr.mxu0 0.0
    %1796 = vmatpush2.msra.mxu0 0.0
    %1797 = vmatprep.subr.mxu0 0.0
    %1798 = vmatpush2.msra.mxu0 0.0
    %1799 = vmatprep.subr.mxu0 0.0
    %1800 = vmatpush2.msra.mxu0 0.0
    %1801 = vmatprep.subr.mxu0 0.0
    %1802 = vmatpush2.msra.mxu0 0.0
    %1803 = vmatprep.subr.mxu0 0.0
    %1804 = vmatpush2.msra.mxu0 0.0
    %1805 = vmatprep.mubr.f32.mxu0 0.0
    %1806 = vmatmul.mubr.f32.gmra.mxu0 %v1738
    %v1807 = vpop.f32.mrf.mxu0
    %v1808 = vadd.f32 %v716, %v1807
    %v1809 = vpop.f32.mrf.mxu0
    %v1810 = vadd.f32 %v720, %v1809
    %1811 = vdwg.mxu0
    %1812 = vmatprep.subr.mxu0 %v710
    %1813 = vmatpush1.msra.mxu0 %v709
    %1814 = vmatprep.subr.mxu0 %v706
    %1815 = vmatpush1.msra.mxu0 %v705
    %1816 = vmatprep.subr.mxu0 %v702
    %1817 = vmatpush1.msra.mxu0 %v701
    %1818 = vmatprep.subr.mxu0 %v698
    %1819 = vmatpush1.msra.mxu0 %v697
    %1820 = vmatprep.subr.mxu0 %v694
    %1821 = vmatpush1.msra.mxu0 %v693
    %1822 = vmatprep.subr.mxu0 %v690
    %1823 = vmatpush1.msra.mxu0 %v689
    %1824 = vmatprep.subr.mxu0 %v686
    %1825 = vmatpush1.msra.mxu0 %v685
    %1826 = vmatprep.subr.mxu0 %v682
    %1827 = vmatpush1.msra.mxu0 %v681
    %1828 = vmatprep.subr.mxu0 %v678
    %1829 = vmatpush1.msra.mxu0 %v677
    %1830 = vmatprep.subr.mxu0 %v674
    %1831 = vmatpush1.msra.mxu0 %v673
    %1832 = vmatprep.subr.mxu0 %v670
    %1833 = vmatpush1.msra.mxu0 %v669
    %1834 = vmatprep.subr.mxu0 %v666
    %1835 = vmatpush1.msra.mxu0 %v665
    %1836 = vmatprep.subr.mxu0 %v662
    %1837 = vmatpush1.msra.mxu0 %v661
    %1838 = vmatprep.subr.mxu0 %v658
    %1839 = vmatpush1.msra.mxu0 %v657
    %1840 = vmatprep.subr.mxu0 %v654
    %1841 = vmatpush1.msra.mxu0 %v653
    %1842 = vmatprep.subr.mxu0 %v650
    %1843 = vmatpush1.msra.mxu0 %v649
    %1844 = vmatprep.subr.mxu0 0.0
    %1845 = vmatpush2.msra.mxu0 0.0
    %1846 = vmatprep.subr.mxu0 0.0
    %1847 = vmatpush2.msra.mxu0 0.0
    %1848 = vmatprep.subr.mxu0 0.0
    %1849 = vmatpush2.msra.mxu0 0.0
    %1850 = vmatprep.subr.mxu0 0.0
    %1851 = vmatpush2.msra.mxu0 0.0
    %1852 = vmatprep.subr.mxu0 0.0
    %1853 = vmatpush2.msra.mxu0 0.0
    %1854 = vmatprep.subr.mxu0 0.0
    %1855 = vmatpush2.msra.mxu0 0.0
    %1856 = vmatprep.subr.mxu0 0.0
    %1857 = vmatpush2.msra.mxu0 0.0
    %1858 = vmatprep.subr.mxu0 0.0
    %1859 = vmatpush2.msra.mxu0 0.0
    %1860 = vmatprep.subr.mxu0 0.0
    %1861 = vmatpush2.msra.mxu0 0.0
    %1862 = vmatprep.subr.mxu0 0.0
    %1863 = vmatpush2.msra.mxu0 0.0
    %1864 = vmatprep.subr.mxu0 0.0
    %1865 = vmatpush2.msra.mxu0 0.0
    %1866 = vmatprep.subr.mxu0 0.0
    %1867 = vmatpush2.msra.mxu0 0.0
    %1868 = vmatprep.subr.mxu0 0.0
    %1869 = vmatpush2.msra.mxu0 0.0
    %1870 = vmatprep.subr.mxu0 0.0
    %1871 = vmatpush2.msra.mxu0 0.0
    %1872 = vmatprep.subr.mxu0 0.0
    %1873 = vmatpush2.msra.mxu0 0.0
    %1874 = vmatprep.subr.mxu0 0.0
    %1875 = vmatpush2.msra.mxu0 0.0
    %1876 = vmatprep.mubr.f32.mxu0 0.0
    %1877 = vmatmul.mubr.f32.gmra.mxu0 %v1738
    %v1878 = vpop.f32.mrf.mxu0
    %v1879 = vadd.f32 %v724, %v1878
    %v1880 = vpop.f32.mrf.mxu0
    %v1881 = vadd.f32 %v728, %v1880
    %1882 = vdwg.mxu0
    %v1883 = vxor.u32 %v1808, 2147483648
    %v1884 = vxor.u32 %v1810, 2147483648
    %v1885 = vxor.u32 %v1879, 2147483648
    %v1886 = vmul.f32 %v1883, 1.442695
    %v1887 = vpow.pop %v1886
    %v1888 = vmul.f32 %v1884, 1.442695
    %v1889 = vpow.pop %v1888
    %v1890 = vmul.f32 %v1885, 1.442695
    %v1891 = vpow.pop %v1890
    %v1892 = vadd.f32 %v1887, 1.0
    %v1893 = vadd.f32 %v1889, 1.0
    %v1894 = vadd.f32 %v1891, 1.0
    %v1895 = vrcp.pop %v1892
    %v1896 = vmul.f32 1.0, %v1895
    %v1897 = vrcp.pop %v1893
    %v1898 = vmul.f32 1.0, %v1897
    %v1899 = vrcp.pop %v1894
    %v1900 = vmul.f32 1.0, %v1899
    %v1901 = vtanh.pop %v1881
    %v1902 = vmul.f32 %v1898, %v1736
    %v1903 = vmul.f32 %v1896, %v1901
    %v1904 = vadd.f32 %v1902, %v1903
    %v1905 = vtanh.pop %v1904
    %v1906 = vmul.f32 %v1900, %v1905
    %s1907 = scalar_lea.vmem [#allocation2], 56
    %1908 = vst [vmem:[%s1907] sm:$0xff] %v1906
    %1909 = vst [vmem:[#allocation15] sm:$0xff] %v1906
    %v1910 = vld [vmem:[#allocation2] sm:$0xff]
    %v1911 = vld [vmem:[#allocation2 + $0x8] sm:$0xff]
    %v1912 = vld [vmem:[#allocation2 + $0x10] sm:$0xff]
    %v1913 = vld [vmem:[#allocation2 + $0x18] sm:$0xff]
    %v1914 = vld [vmem:[#allocation2 + $0x20] sm:$0xff]
    %v1915 = vld [vmem:[#allocation2 + $0x28] sm:$0xff]
    %v1916 = vld [vmem:[#allocation2 + $0x30] sm:$0xff]
    %v1917 = vld [vmem:[#allocation2 + $0x38] sm:$0xff]
    %v1918 = vld [vmem:[#allocation12] sm:$0xff]
    %v1919 = vld [vmem:[#allocation12 + $0x8] sm:$0xff]
    %v1920 = vld [vmem:[#allocation12 + $0x10] sm:$0xff]
    %v1921 = vld [vmem:[#allocation12 + $0x18] sm:$0xff]
    %v1922 = vld [vmem:[#allocation12 + $0x20] sm:$0xff]
    %v1923 = vld [vmem:[#allocation12 + $0x28] sm:$0xff]
    %v1924 = vld [vmem:[#allocation12 + $0x30] sm:$0xff]
    %v1925 = vld [vmem:[#allocation12 + $0x38] sm:$0xff]
    %v1926 = vld [vmem:[#allocation12 + $0x40] sm:$0xff]
    %v1927 = vld [vmem:[#allocation12 + $0x48] sm:$0xff]
    %v1928 = vld [vmem:[#allocation12 + $0x50] sm:$0xff]
    %v1929 = vld [vmem:[#allocation12 + $0x58] sm:$0xff]
    %v1930 = vld [vmem:[#allocation12 + $0x60] sm:$0xff]
    %v1931 = vld [vmem:[#allocation12 + $0x68] sm:$0xff]
    %v1932 = vld [vmem:[#allocation12 + $0x70] sm:$0xff]
    %v1933 = vld [vmem:[#allocation12 + $0x78] sm:$0xff]
    %v1934 = vld [vmem:[%s11] sm:$0x1]
    %v1936 = vlaneseq
    %v1937 = vshrl.u32 %v1936, 7
    %v1938 = vsub.s32 0, %v1937
    %v1939 = vrot.slane %v1934, %v1938
    %1941 = vmatprep.subr.mxu0 0.0
    %1942 = vmatpush1.msra.mxu0 %v1933
    %1943 = vmatprep.subr.mxu0 0.0
    %1944 = vmatpush1.msra.mxu0 %v1932
    %1945 = vmatprep.subr.mxu0 0.0
    %1946 = vmatpush1.msra.mxu0 %v1931
    %1947 = vmatprep.subr.mxu0 0.0
    %1948 = vmatpush1.msra.mxu0 %v1930
    %1949 = vmatprep.subr.mxu0 0.0
    %1950 = vmatpush1.msra.mxu0 %v1929
    %1951 = vmatprep.subr.mxu0 0.0
    %1952 = vmatpush1.msra.mxu0 %v1928
    %1953 = vmatprep.subr.mxu0 0.0
    %1954 = vmatpush1.msra.mxu0 %v1927
    %1955 = vmatprep.subr.mxu0 0.0
    %1956 = vmatpush1.msra.mxu0 %v1926
    %1957 = vmatprep.subr.mxu0 0.0
    %1958 = vmatpush1.msra.mxu0 %v1925
    %1959 = vmatprep.subr.mxu0 0.0
    %1960 = vmatpush1.msra.mxu0 %v1924
    %1961 = vmatprep.subr.mxu0 0.0
    %1962 = vmatpush1.msra.mxu0 %v1923
    %1963 = vmatprep.subr.mxu0 0.0
    %1964 = vmatpush1.msra.mxu0 %v1922
    %1965 = vmatprep.subr.mxu0 0.0
    %1966 = vmatpush1.msra.mxu0 %v1921
    %1967 = vmatprep.subr.mxu0 0.0
    %1968 = vmatpush1.msra.mxu0 %v1920
    %1969 = vmatprep.subr.mxu0 0.0
    %1970 = vmatpush1.msra.mxu0 %v1919
    %1971 = vmatprep.subr.mxu0 0.0
    %1972 = vmatpush1.msra.mxu0 %v1918
    %1973 = vmatprep.subr.mxu0 0.0
    %1974 = vmatpush2.msra.mxu0 0.0
    %1975 = vmatprep.subr.mxu0 0.0
    %1976 = vmatpush2.msra.mxu0 0.0
    %1977 = vmatprep.subr.mxu0 0.0
    %1978 = vmatpush2.msra.mxu0 0.0
    %1979 = vmatprep.subr.mxu0 0.0
    %1980 = vmatpush2.msra.mxu0 0.0
    %1981 = vmatprep.subr.mxu0 0.0
    %1982 = vmatpush2.msra.mxu0 0.0
    %1983 = vmatprep.subr.mxu0 0.0
    %1984 = vmatpush2.msra.mxu0 0.0
    %1985 = vmatprep.subr.mxu0 0.0
    %1986 = vmatpush2.msra.mxu0 0.0
    %1987 = vmatprep.subr.mxu0 0.0
    %1988 = vmatpush2.msra.mxu0 0.0
    %1989 = vmatprep.subr.mxu0 0.0
    %1990 = vmatpush2.msra.mxu0 0.0
    %1991 = vmatprep.subr.mxu0 0.0
    %1992 = vmatpush2.msra.mxu0 0.0
    %1993 = vmatprep.subr.mxu0 0.0
    %1994 = vmatpush2.msra.mxu0 0.0
    %1995 = vmatprep.subr.mxu0 0.0
    %1996 = vmatpush2.msra.mxu0 0.0
    %1997 = vmatprep.subr.mxu0 0.0
    %1998 = vmatpush2.msra.mxu0 0.0
    %1999 = vmatprep.subr.mxu0 0.0
    %2000 = vmatpush2.msra.mxu0 0.0
    %2001 = vmatprep.subr.mxu0 0.0
    %2002 = vmatpush2.msra.mxu0 0.0
    %2003 = vmatprep.subr.mxu0 0.0
    %2004 = vmatpush2.msra.mxu0 0.0
    %2005 = vmatprep.mubr.f32.mxu0 0.0
    %2006 = vmatmul.mubr.f32.gmra.mxu0 %v1910
    %v2007 = vpop.f32.mrf.mxu0
    %v2008 = vadd.f32 %v1939, %v2007
    %v2009 = vpop.f32.mrf.mxu0
    %2010 = vmatprep.mubr.f32.mxu0 0.0
    %2011 = vmatmul.mubr.f32.gmra.mxu0 %v1911
    %v2012 = vpop.f32.mrf.mxu0
    %v2013 = vadd.f32 %v1939, %v2012
    %v2014 = vpop.f32.mrf.mxu0
    %2015 = vmatprep.mubr.f32.mxu0 0.0
    %2016 = vmatmul.mubr.f32.gmra.mxu0 %v1912
    %v2017 = vpop.f32.mrf.mxu0
    %v2018 = vadd.f32 %v1939, %v2017
    %v2019 = vpop.f32.mrf.mxu0
    %2020 = vmatprep.mubr.f32.mxu0 0.0
    %2021 = vmatmul.mubr.f32.gmra.mxu0 %v1913
    %v2022 = vpop.f32.mrf.mxu0
    %v2023 = vadd.f32 %v1939, %v2022
    %v2024 = vpop.f32.mrf.mxu0
    %2025 = vmatprep.mubr.f32.mxu0 0.0
    %2026 = vmatmul.mubr.f32.gmra.mxu0 %v1914
    %v2027 = vpop.f32.mrf.mxu0
    %v2028 = vadd.f32 %v1939, %v2027
    %v2029 = vpop.f32.mrf.mxu0
    %2030 = vmatprep.mubr.f32.mxu0 0.0
    %2031 = vmatmul.mubr.f32.gmra.mxu0 %v1915
    %v2032 = vpop.f32.mrf.mxu0
    %v2033 = vadd.f32 %v1939, %v2032
    %v2034 = vpop.f32.mrf.mxu0
    %2035 = vmatprep.mubr.f32.mxu0 0.0
    %2036 = vmatmul.mubr.f32.gmra.mxu0 %v1916
    %v2037 = vpop.f32.mrf.mxu0
    %v2038 = vadd.f32 %v1939, %v2037
    %v2039 = vpop.f32.mrf.mxu0
    %2040 = vmatprep.mubr.f32.mxu0 0.0
    %2041 = vmatmul.mubr.f32.gmra.mxu0 %v1917
    %v2042 = vpop.f32.mrf.mxu0
    %v2043 = vadd.f32 %v1939, %v2042
    %v2044 = vpop.f32.mrf.mxu0
    %2045 = vdwg.mxu0
    %2046 = vst [vmem:[#allocation14] sm:$0xff] %v2008
    %2047 = vst [vmem:[#allocation14 + $0x8] sm:$0xff] %v2013
    %2048 = vst [vmem:[#allocation14 + $0x10] sm:$0xff] %v2018
    %2049 = vst [vmem:[#allocation14 + $0x18] sm:$0xff] %v2023
    %2050 = vst [vmem:[#allocation14 + $0x20] sm:$0xff] %v2028
    %2051 = vst [vmem:[#allocation14 + $0x28] sm:$0xff] %v2033
    %2052 = vst [vmem:[#allocation14 + $0x30] sm:$0xff] %v2038
    %2053 = vst [vmem:[#allocation14 + $0x38] sm:$0xff] %v2043
    // Predicated region
    $region74: #{tpu_custom_call.1} parent=1 // pred_check
      _
    $region75: #{tpu_custom_call.1} parent=1 // pred_check_branch
      %2055 = sbr.rel (0) target = $region77
    $region76: #{tpu_custom_call.1} parent=1 // pred_region
      %s2057 = ssub.s32 1024, 1024
      %2058 = vsyncadd [#allocation5], %s2057
      %s2059 = sshll.u32 [#allocation14], 4
      %s2060 = int_to_ptr.vmem [resolvable:$true] %s2059
      %2065 = dma.vmem_to_hbm [thread:$0]  %s2060, 1024, %s12, [#allocation5], 128, 128, 8
    $region77: #{tpu_custom_call.1} parent=1 // pred_fallthru
      _
    // Predicated region
    $region78: #{tpu_custom_call.1} parent=1 // pred_check
      _
    $region79: #{tpu_custom_call.1} parent=1 // pred_check_branch
      %2067 = sbr.rel (0) target = $region81
    $region80: #{tpu_custom_call.1} parent=1 // pred_region
      %s2069 = ssub.s32 128, 128
      %2070 = vsyncadd [#allocation16], %s2069
      %s2072 = sshll.u32 [#allocation15], 4
      %s2073 = int_to_ptr.vmem [resolvable:$true] %s2072
      %2075 = dma.vmem_to_hbm [thread:$0]  %s2073, 128, %s13, [#allocation16]
    $region81: #{tpu_custom_call.1} parent=1 // pred_fallthru
      _
    // Predicated region
    $region82: #{tpu_custom_call.1} parent=1 // pred_check
      _
    $region83: #{tpu_custom_call.1} parent=1 // pred_check_branch
      %2077 = sbr.rel (0) target = $region85
    $region84: #{tpu_custom_call.1} parent=1 // pred_region
      %2078 = dma.done [#allocation5], 1024
    $region85: #{tpu_custom_call.1} parent=1 // pred_fallthru
      _
    // Predicated region
    $region86: #{tpu_custom_call.1} parent=1 // pred_check
      _
    $region87: #{tpu_custom_call.1} parent=1 // pred_check_branch
      %2080 = sbr.rel (0) target = $region89
    $region88: #{tpu_custom_call.1} parent=1 // pred_region
      %2081 = dma.done [#allocation16], 128
    $region89: #{tpu_custom_call.1} parent=1 // pred_fallthru
      _
    %2082 = vsyncpa [#allocation4], 1
    %2083 = vsyncpa [#allocation7], 1
    %2084 = vsyncpa [#allocation10], 1
    %2085 = vsyncpa [#allocation13], 1
    %2086 = vsyncpa [#allocation5], 1
    %2087 = vsyncpa [#allocation16], 1

</llo_original>
